<compile_context>
chip_gen: v6e
topology: v6e:2x2x1
jax: 0.10.0
libtpu: 0.0.40
codegen_flags: <defaults>
</compile_context>

<pallas_src>
import functools

import jax
import jax.numpy as jnp
from jax.experimental import pallas as pl
from jax.experimental.pallas import tpu as pltpu

KH = KW = 3  # 3x3 valid conv, stride 1


# ----------------------------- fused Pallas kernel -----------------------------

def _insta_fused_kernel(p_ref, u_ref,
                        wc_ref, bci_ref, fwi_ref, fbi_ref,
                        bcm_ref, fwm_ref, fbm_ref,
                        out_ref, inv_ref,
                        *, num_samples, hidden_inv, inv_spatial):
    """One grid step == one input image.  All intermediates stay in VMEM."""
    patches = p_ref[0]                                             # (P, K) f32

    # ---------- ONE conv matmul for BOTH nets (weights lane-concatenated) ----
    conv_cat = jnp.dot(patches, wc_ref[...],
                       preferred_element_type=jnp.float32)         # (P, Hi+Hm)
    conv_i = conv_cat[:, :hidden_inv]                               # (P, Hi)
    conv_m = conv_cat[:, hidden_inv:]                               # (P, Hm), no bias

    # ---------- invariance net: +bias -> relu -> GAP -> fc ----------
    act_i = jnp.maximum(conv_i + bci_ref[...], 0.0)
    gap_i = jnp.sum(act_i, axis=0, keepdims=True) * inv_spatial     # (1, Hi)
    inv_param = (jnp.dot(gap_i, fwi_ref[...],
                         preferred_element_type=jnp.float32)
                 + fbi_ref[...])                                    # (1, 2)
    inv_ref[0] = inv_param

    # ---------- sample_param: param = lb + u * (ub - lb) ----------
    lb = inv_param[:, 0:1]                                          # (1, 1)
    ub = inv_param[:, 1:2]                                          # (1, 1)
    param = lb + u_ref[0] * (ub - lb)                               # (1, S)

    # ---------- model net on color_aug(x, param) ----------
    # conv(param*x) + b == param * conv_nobias(x) + b, so each sample is only a
    # cheap VPU scale/bias/relu; one XLU spatial reduce at the end.
    act_sum = jnp.zeros_like(conv_m)                                # (P, Hm)
    for s in range(num_samples):                                    # tiny static unroll
        act_sum = act_sum + jnp.maximum(
            param[:, s:s + 1] * conv_m + bcm_ref[...], 0.0)
    # mean over spatial positions and samples (fc linear => mean commutes).
    gap_mean = (jnp.sum(act_sum, axis=0, keepdims=True)
                * (inv_spatial / num_samples))                      # (1, Hm)
    logits = (jnp.dot(gap_mean, fwm_ref[...],
                      preferred_element_type=jnp.float32)
              + fbm_ref[...])                                       # (1, NC)
    out_ref[0] = logits


# ------------------------------- host-side glue --------------------------------

def im2col_nhwc(x_nchw):
    """NCHW -> (N, Ho*Wo, KH*KW*C) patch rows via NHWC slices + concat."""
    # TODO(synk): generate patches fully in-kernel (pl.ds windows) if spatial
    # dims ever grow enough for this one-time 9x expansion to matter.
    x = jnp.transpose(x_nchw, (0, 2, 3, 1))                         # (N, H, W, C)
    N, H, W, C = x.shape
    Ho, Wo = H - KH + 1, W - KW + 1
    cols = [x[:, i:i + Ho, j:j + Wo, :] for i in range(KH) for j in range(KW)]
    p = jnp.concatenate(cols, axis=-1)                              # (N, Ho, Wo, KH*KW*C)
    return p.reshape(N, Ho * Wo, KH * KW * C)


def pack_params(params):
    """One-time host-side weight prep into kernel-ready (pre-transposed) layouts."""
    def conv_mat(w):
        cout, cin, kh, kw = w.shape
        # row k = (i*KW + j)*Cin + c  -- matches im2col_nhwc's patch ordering.
        return jnp.transpose(w, (2, 3, 1, 0)).reshape(kh * kw * cin, cout)

    wci = conv_mat(params["inv"]["conv_w"])                         # (K, Hi)
    wcm = conv_mat(params["model"]["conv_w"])                       # (K, Hm)
    return {
        "conv_w_cat": jnp.concatenate([wci, wcm], axis=1),          # (K, Hi+Hm)
        "inv": {
            "conv_b": params["inv"]["conv_b"].reshape(1, -1),       # (1, Hi)
            "fc_w": params["inv"]["fc_w"].T,                        # (Hi, 2)
            "fc_b": params["inv"]["fc_b"].reshape(1, -1),           # (1, 2)
        },
        "model": {
            "conv_b": params["model"]["conv_b"].reshape(1, -1),     # (1, Hm)
            "fc_w": params["model"]["fc_w"].T,                      # (Hm, NC)
            "fc_b": params["model"]["fc_b"].reshape(1, -1),         # (1, NC)
        },
    }


def insta_model_forward(packed, x, u):
    """Mirrors InstaModel.forward -> (outputs, inv_param).

    x: (bs, 3, H, W) f32.  u: (bs, num_samples) uniform[0,1) draws (the
    torch.rand of sample_param), consumed inside the kernel.
    """
    bs = x.shape[0]
    num_samples = u.shape[1]
    patches = im2col_nhwc(x)                                        # (bs, P, K)
    _, P, K = patches.shape
    u3 = u.reshape(bs, 1, num_samples)

    pi, pm = packed["inv"], packed["model"]
    Hi = pi["fc_w"].shape[0]
    Hm = pm["fc_w"].shape[0]
    NC = pm["fc_w"].shape[1]
    wc = packed["conv_w_cat"]                                       # (K, Hi+Hm)

    kernel = functools.partial(_insta_fused_kernel,
                               num_samples=num_samples,
                               hidden_inv=Hi,
                               inv_spatial=1.0 / float(P))

    outputs, inv_param = pl.pallas_call(
        kernel,
        out_shape=(jax.ShapeDtypeStruct((bs, 1, NC), jnp.float32),
                   jax.ShapeDtypeStruct((bs, 1, 2), jnp.float32)),
        grid_spec=pltpu.PrefetchScalarGridSpec(
            num_scalar_prefetch=0,
            grid=(bs,),
            in_specs=[
                pl.BlockSpec((1, P, K), lambda b: (b, 0, 0)),            # patches
                pl.BlockSpec((1, 1, num_samples), lambda b: (b, 0, 0)),  # uniforms
                pl.BlockSpec((K, Hi + Hm), lambda b: (0, 0)),  # weights stay VMEM-resident
                pl.BlockSpec((1, Hi), lambda b: (0, 0)),
                pl.BlockSpec((Hi, 2), lambda b: (0, 0)),
                pl.BlockSpec((1, 2), lambda b: (0, 0)),
                pl.BlockSpec((1, Hm), lambda b: (0, 0)),
                pl.BlockSpec((Hm, NC), lambda b: (0, 0)),
                pl.BlockSpec((1, NC), lambda b: (0, 0)),
            ],
            out_specs=(
                pl.BlockSpec((1, 1, NC), lambda b: (b, 0, 0)),
                pl.BlockSpec((1, 1, 2), lambda b: (b, 0, 0)),
            ),
        ),
        compiler_params=pltpu.CompilerParams(
            dimension_semantics=("parallel",)),  # megacore splits the batch
    )(patches, u3,
      wc, pi["conv_b"], pi["fc_w"], pi["fc_b"],
      pm["conv_b"], pm["fc_w"], pm["fc_b"])

    return outputs[:, 0, :], inv_param[:, 0, :]


# ------------------------------ params / reference ------------------------------

def init_params(key, hidden, num_classes):
    ks = jax.random.split(key, 4)

    def conv_init(k, cout, cin, kh, kw):
        fan_in = cin * kh * kw
        return jax.random.normal(k, (cout, cin, kh, kw), jnp.float32) * (2.0 / fan_in) ** 0.5

    def lin_init(k, out_f, in_f):
        return jax.random.normal(k, (out_f, in_f), jnp.float32) * (1.0 / in_f) ** 0.5

    return {
        "inv": {
            "conv_w": conv_init(ks[0], hidden, 3, 3, 3),
            "conv_b": jnp.zeros((hidden,), jnp.float32),
            "fc_w": lin_init(ks[1], 2, hidden),
            "fc_b": jnp.zeros((2,), jnp.float32),
        },
        "model": {
            "conv_w": conv_init(ks[2], hidden, 3, 3, 3),
            "conv_b": jnp.zeros((hidden,), jnp.float32),
            "fc_w": lin_init(ks[3], num_classes, hidden),
            "fc_b": jnp.zeros((num_classes,), jnp.float32),
        },
    }


def reference_forward(params, x, u):
    """Plain-XLA reference implementing the original InstaModel graph literally
    (repeat + color_aug + per-sample conv); used only as a correctness check."""
    hi = jax.lax.Precision.HIGHEST

    def net(p, xb):
        cout = p["conv_w"].shape[0]
        patches = im2col_nhwc(xb)                                   # (N, P, K)
        w2 = jnp.transpose(p["conv_w"], (2, 3, 1, 0)).reshape(-1, cout)
        y = jnp.einsum("npk,kc->npc", patches, w2, precision=hi) + p["conv_b"]
        h = jnp.mean(jnp.maximum(y, 0.0), axis=1)                   # GAP -> (N, cout)
        return jnp.dot(h, p["fc_w"].T, precision=hi) + p["fc_b"]

    bs, num_samples = u.shape
    inv_param = net(params["inv"], x)                               # (bs, 2)
    lb, ub = inv_param[:, 0:1], inv_param[:, 1:2]
    param = lb + u * (ub - lb)                                      # (bs, S)
    x_rep = jnp.repeat(x, num_samples, axis=0)                      # (bs*S, 3, H, W)
    transformed = x_rep * param.reshape(-1, 1, 1, 1)                # color_aug
    out = net(params["model"], transformed)                         # (bs*S, NC)
    out = out.reshape(bs, num_samples, -1).mean(axis=1)
    return out, inv_param


if __name__ == "__main__":
    key = jax.random.PRNGKey(0)
    k_x, k_p, k_s = jax.random.split(key, 3)

    bs, C, H, W = 2, 3, 16, 16
    num_samples = 4
    num_classes = 10
    hidden = 8

    x = jax.random.uniform(k_x, (bs, C, H, W), dtype=jnp.float32)
    params = init_params(k_p, hidden, num_classes)
    packed = pack_params(params)                   # host-side weight prep, once
    u = jax.random.uniform(k_s, (bs, num_samples), dtype=jnp.float32)

    fwd = jax.jit(insta_model_forward)
    outputs, inv_param = fwd(packed, x, u)
    jax.block_until_ready((outputs, inv_param))

    assert outputs.shape == (bs, num_classes), outputs.shape
    assert inv_param.shape == (bs, 2), inv_param.shape
    assert outputs.dtype == jnp.float32 and inv_param.dtype == jnp.float32

    # Correctness vs the literal (repeat + color_aug) graph; loose tolerance to
    # allow for MXU f32-emulation rounding differences.
    ref_out, ref_inv = reference_forward(params, x, u)
    assert jnp.allclose(inv_param, ref_inv, atol=2e-2, rtol=2e-2), (
        float(jnp.max(jnp.abs(inv_param - ref_inv))))
    assert jnp.allclose(outputs, ref_out, atol=2e-2, rtol=2e-2), (
        float(jnp.max(jnp.abs(outputs - ref_out))))

    print("KERNEL_OK")
</pallas_src>

<mosaic_0001>
module attributes {stable_mosaic.version = 11 : i64} {
  func.func @_insta_fused_kernel(%arg0: i32, %arg1: memref<1x196x27xf32, #tpu.memory_space<vmem>>, %arg2: memref<1x1x4xf32, #tpu.memory_space<vmem>>, %arg3: memref<27x16xf32, #tpu.memory_space<vmem>>, %arg4: memref<1x8xf32, #tpu.memory_space<vmem>>, %arg5: memref<8x2xf32, #tpu.memory_space<vmem>>, %arg6: memref<1x2xf32, #tpu.memory_space<vmem>>, %arg7: memref<1x8xf32, #tpu.memory_space<vmem>>, %arg8: memref<8x10xf32, #tpu.memory_space<vmem>>, %arg9: memref<1x10xf32, #tpu.memory_space<vmem>>, %arg10: memref<1x1x10xf32, #tpu.memory_space<vmem>>, %arg11: memref<1x1x2xf32, #tpu.memory_space<vmem>>) attributes {dimension_semantics = [#tpu.dimension_semantics<parallel>], iteration_bounds = array<i64: 2>, scalar_prefetch = 0 : i64, scratch_operands = 0 : i64, tpu.core_type = #tpu.core_type<tc>, window_params = [{transform_indices = @transform_0, window_bounds = array<i64: 1, 196, 27>}, {transform_indices = @transform_1, window_bounds = array<i64: 1, 1, 4>}, {pipeline_mode = #tpu.pipeline_mode<synchronous>, transform_indices = @transform_2, window_bounds = array<i64: 27, 16>}, {pipeline_mode = #tpu.pipeline_mode<synchronous>, transform_indices = @transform_3, window_bounds = array<i64: 1, 8>}, {pipeline_mode = #tpu.pipeline_mode<synchronous>, transform_indices = @transform_4, window_bounds = array<i64: 8, 2>}, {pipeline_mode = #tpu.pipeline_mode<synchronous>, transform_indices = @transform_5, window_bounds = array<i64: 1, 2>}, {pipeline_mode = #tpu.pipeline_mode<synchronous>, transform_indices = @transform_6, window_bounds = array<i64: 1, 8>}, {pipeline_mode = #tpu.pipeline_mode<synchronous>, transform_indices = @transform_7, window_bounds = array<i64: 8, 10>}, {pipeline_mode = #tpu.pipeline_mode<synchronous>, transform_indices = @transform_8, window_bounds = array<i64: 1, 10>}, {transform_indices = @transform_9, window_bounds = array<i64: 1, 1, 10>}, {transform_indices = @transform_10, window_bounds = array<i64: 1, 1, 2>}]} {
    %c0 = arith.constant 0 : index
    %c0_0 = arith.constant 0 : index
    %c0_1 = arith.constant 0 : index
    %0 = vector.load %arg1[%c0, %c0_0, %c0_1] : memref<1x196x27xf32, #tpu.memory_space<vmem>>, vector<1x196x27xf32>
    %1 = vector.shape_cast %0 : vector<1x196x27xf32> to vector<196x27xf32>
    %c0_2 = arith.constant 0 : index
    %c0_3 = arith.constant 0 : index
    %2 = vector.load %arg3[%c0_2, %c0_3] : memref<27x16xf32, #tpu.memory_space<vmem>>, vector<27x16xf32>
    %cst = arith.constant dense<0.000000e+00> : vector<196x16xf32>
    %3 = tpu.matmul %1, %2, %cst {dimension_numbers = #tpu.dot_dimension_numbers<[1], [0], [0], [1], [0, 0, 1, 1], [], []>} : vector<196x27xf32>, vector<27x16xf32>, vector<196x16xf32> -> vector<196x16xf32>
    %4 = vector.extract_strided_slice %3 {offsets = [0, 0], sizes = [196, 8], strides = [1, 1]} : vector<196x16xf32> to vector<196x8xf32>
    %5 = vector.extract_strided_slice %3 {offsets = [0, 8], sizes = [196, 8], strides = [1, 1]} : vector<196x16xf32> to vector<196x8xf32>
    %c0_4 = arith.constant 0 : index
    %c0_5 = arith.constant 0 : index
    %6 = vector.load %arg4[%c0_4, %c0_5] : memref<1x8xf32, #tpu.memory_space<vmem>>, vector<1x8xf32>
    %7 = vector.broadcast %6 : vector<1x8xf32> to vector<196x8xf32>
    %8 = arith.addf %4, %7 : vector<196x8xf32>
    %cst_6 = arith.constant 0.000000e+00 : f32
    %9 = vector.broadcast %cst_6 : f32 to vector<196x8xf32>
    %10 = arith.maximumf %8, %9 : vector<196x8xf32>
    %cst_7 = arith.constant dense<0.000000e+00> : vector<8xf32>
    %11 = vector.multi_reduction <add>, %10, %cst_7 [0] : vector<196x8xf32> to vector<8xf32>
    %12 = vector.shape_cast %11 : vector<8xf32> to vector<1x8xf32>
    %cst_8 = arith.constant 0.00510204071 : f32
    %13 = vector.broadcast %cst_8 : f32 to vector<1x8xf32>
    %14 = arith.mulf %12, %13 : vector<1x8xf32>
    %c0_9 = arith.constant 0 : index
    %c0_10 = arith.constant 0 : index
    %15 = vector.load %arg5[%c0_9, %c0_10] : memref<8x2xf32, #tpu.memory_space<vmem>>, vector<8x2xf32>
    %cst_11 = arith.constant dense<0.000000e+00> : vector<1x2xf32>
    %16 = tpu.matmul %14, %15, %cst_11 {dimension_numbers = #tpu.dot_dimension_numbers<[1], [0], [0], [1], [0, 0, 1, 1], [], []>} : vector<1x8xf32>, vector<8x2xf32>, vector<1x2xf32> -> vector<1x2xf32>
    %c0_12 = arith.constant 0 : index
    %c0_13 = arith.constant 0 : index
    %17 = vector.load %arg6[%c0_12, %c0_13] : memref<1x2xf32, #tpu.memory_space<vmem>>, vector<1x2xf32>
    %18 = arith.addf %16, %17 : vector<1x2xf32>
    %c0_14 = arith.constant 0 : index
    %c0_15 = arith.constant 0 : index
    %c0_16 = arith.constant 0 : index
    %19 = vector.load %arg11[%c0_14, %c0_15, %c0_16] : memref<1x1x2xf32, #tpu.memory_space<vmem>>, vector<1x1x2xf32>
    %20 = vector.shape_cast %19 : vector<1x1x2xf32> to vector<1x2xf32>
    %21 = vector.shape_cast %18 : vector<1x2xf32> to vector<1x1x2xf32>
    tpu.vector_store %arg11[%c0_14, %c0_15, %c0_16], %21 {strides = array<i32>} : memref<1x1x2xf32, #tpu.memory_space<vmem>>, vector<1x1x2xf32>,
    %22 = vector.extract_strided_slice %18 {offsets = [0, 0], sizes = [1, 1], strides = [1, 1]} : vector<1x2xf32> to vector<1x1xf32>
    %23 = vector.extract_strided_slice %18 {offsets = [0, 1], sizes = [1, 1], strides = [1, 1]} : vector<1x2xf32> to vector<1x1xf32>
    %c0_17 = arith.constant 0 : index
    %c0_18 = arith.constant 0 : index
    %c0_19 = arith.constant 0 : index
    %24 = vector.load %arg2[%c0_17, %c0_18, %c0_19] : memref<1x1x4xf32, #tpu.memory_space<vmem>>, vector<1x1x4xf32>
    %25 = vector.shape_cast %24 : vector<1x1x4xf32> to vector<1x4xf32>
    %26 = arith.subf %23, %22 : vector<1x1xf32>
    %27 = vector.broadcast %26 : vector<1x1xf32> to vector<1x4xf32>
    %28 = arith.mulf %25, %27 : vector<1x4xf32>
    %29 = vector.broadcast %22 : vector<1x1xf32> to vector<1x4xf32>
    %30 = arith.addf %29, %28 : vector<1x4xf32>
    %cst_20 = arith.constant 0.000000e+00 : f32
    %31 = vector.broadcast %cst_20 : f32 to vector<196x8xf32>
    %32 = vector.extract_strided_slice %30 {offsets = [0, 0], sizes = [1, 1], strides = [1, 1]} : vector<1x4xf32> to vector<1x1xf32>
    %33 = vector.broadcast %32 : vector<1x1xf32> to vector<196x8xf32>
    %34 = arith.mulf %33, %5 : vector<196x8xf32>
    %c0_21 = arith.constant 0 : index
    %c0_22 = arith.constant 0 : index
    %35 = vector.load %arg7[%c0_21, %c0_22] : memref<1x8xf32, #tpu.memory_space<vmem>>, vector<1x8xf32>
    %36 = vector.broadcast %35 : vector<1x8xf32> to vector<196x8xf32>
    %37 = arith.addf %34, %36 : vector<196x8xf32>
    %cst_23 = arith.constant 0.000000e+00 : f32
    %38 = vector.broadcast %cst_23 : f32 to vector<196x8xf32>
    %39 = arith.maximumf %37, %38 : vector<196x8xf32>
    %40 = arith.addf %31, %39 : vector<196x8xf32>
    %41 = vector.extract_strided_slice %30 {offsets = [0, 1], sizes = [1, 1], strides = [1, 1]} : vector<1x4xf32> to vector<1x1xf32>
    %42 = vector.broadcast %41 : vector<1x1xf32> to vector<196x8xf32>
    %43 = arith.mulf %42, %5 : vector<196x8xf32>
    %c0_24 = arith.constant 0 : index
    %c0_25 = arith.constant 0 : index
    %44 = vector.load %arg7[%c0_24, %c0_25] : memref<1x8xf32, #tpu.memory_space<vmem>>, vector<1x8xf32>
    %45 = vector.broadcast %44 : vector<1x8xf32> to vector<196x8xf32>
    %46 = arith.addf %43, %45 : vector<196x8xf32>
    %cst_26 = arith.constant 0.000000e+00 : f32
    %47 = vector.broadcast %cst_26 : f32 to vector<196x8xf32>
    %48 = arith.maximumf %46, %47 : vector<196x8xf32>
    %49 = arith.addf %40, %48 : vector<196x8xf32>
    %50 = vector.extract_strided_slice %30 {offsets = [0, 2], sizes = [1, 1], strides = [1, 1]} : vector<1x4xf32> to vector<1x1xf32>
    %51 = vector.broadcast %50 : vector<1x1xf32> to vector<196x8xf32>
    %52 = arith.mulf %51, %5 : vector<196x8xf32>
    %c0_27 = arith.constant 0 : index
    %c0_28 = arith.constant 0 : index
    %53 = vector.load %arg7[%c0_27, %c0_28] : memref<1x8xf32, #tpu.memory_space<vmem>>, vector<1x8xf32>
    %54 = vector.broadcast %53 : vector<1x8xf32> to vector<196x8xf32>
    %55 = arith.addf %52, %54 : vector<196x8xf32>
    %cst_29 = arith.constant 0.000000e+00 : f32
    %56 = vector.broadcast %cst_29 : f32 to vector<196x8xf32>
    %57 = arith.maximumf %55, %56 : vector<196x8xf32>
    %58 = arith.addf %49, %57 : vector<196x8xf32>
    %59 = vector.extract_strided_slice %30 {offsets = [0, 3], sizes = [1, 1], strides = [1, 1]} : vector<1x4xf32> to vector<1x1xf32>
    %60 = vector.broadcast %59 : vector<1x1xf32> to vector<196x8xf32>
    %61 = arith.mulf %60, %5 : vector<196x8xf32>
    %c0_30 = arith.constant 0 : index
    %c0_31 = arith.constant 0 : index
    %62 = vector.load %arg7[%c0_30, %c0_31] : memref<1x8xf32, #tpu.memory_space<vmem>>, vector<1x8xf32>
    %63 = vector.broadcast %62 : vector<1x8xf32> to vector<196x8xf32>
    %64 = arith.addf %61, %63 : vector<196x8xf32>
    %cst_32 = arith.constant 0.000000e+00 : f32
    %65 = vector.broadcast %cst_32 : f32 to vector<196x8xf32>
    %66 = arith.maximumf %64, %65 : vector<196x8xf32>
    %67 = arith.addf %58, %66 : vector<196x8xf32>
    %cst_33 = arith.constant dense<0.000000e+00> : vector<8xf32>
    %68 = vector.multi_reduction <add>, %67, %cst_33 [0] : vector<196x8xf32> to vector<8xf32>
    %69 = vector.shape_cast %68 : vector<8xf32> to vector<1x8xf32>
    %cst_34 = arith.constant 0.00127551018 : f32
    %70 = vector.broadcast %cst_34 : f32 to vector<1x8xf32>
    %71 = arith.mulf %69, %70 : vector<1x8xf32>
    %c0_35 = arith.constant 0 : index
    %c0_36 = arith.constant 0 : index
    %72 = vector.load %arg8[%c0_35, %c0_36] : memref<8x10xf32, #tpu.memory_space<vmem>>, vector<8x10xf32>
    %cst_37 = arith.constant dense<0.000000e+00> : vector<1x10xf32>
    %73 = tpu.matmul %71, %72, %cst_37 {dimension_numbers = #tpu.dot_dimension_numbers<[1], [0], [0], [1], [0, 0, 1, 1], [], []>} : vector<1x8xf32>, vector<8x10xf32>, vector<1x10xf32> -> vector<1x10xf32>
    %c0_38 = arith.constant 0 : index
    %c0_39 = arith.constant 0 : index
    %74 = vector.load %arg9[%c0_38, %c0_39] : memref<1x10xf32, #tpu.memory_space<vmem>>, vector<1x10xf32>
    %75 = arith.addf %73, %74 : vector<1x10xf32>
    %c0_40 = arith.constant 0 : index
    %c0_41 = arith.constant 0 : index
    %c0_42 = arith.constant 0 : index
    %76 = vector.load %arg10[%c0_40, %c0_41, %c0_42] : memref<1x1x10xf32, #tpu.memory_space<vmem>>, vector<1x1x10xf32>
    %77 = vector.shape_cast %76 : vector<1x1x10xf32> to vector<1x10xf32>
    %78 = vector.shape_cast %75 : vector<1x10xf32> to vector<1x1x10xf32>
    tpu.vector_store %arg10[%c0_40, %c0_41, %c0_42], %78 {strides = array<i32>} : memref<1x1x10xf32, #tpu.memory_space<vmem>>, vector<1x1x10xf32>,
    return
  }
  func.func @transform_0(%arg0: i32) -> (i32, i32, i32) {
    %c0_i32 = arith.constant 0 : i32
    %c0_i32_0 = arith.constant 0 : i32
    %c0_i32_1 = arith.constant 0 : i32
    return %arg0, %c0_i32, %c0_i32_0 : i32, i32, i32
  }
  func.func @transform_1(%arg0: i32) -> (i32, i32, i32) {
    %c0_i32 = arith.constant 0 : i32
    %c0_i32_0 = arith.constant 0 : i32
    %c0_i32_1 = arith.constant 0 : i32
    return %arg0, %c0_i32, %c0_i32_0 : i32, i32, i32
  }
  func.func @transform_2(%arg0: i32) -> (i32, i32) {
    %c0_i32 = arith.constant 0 : i32
    %c0_i32_0 = arith.constant 0 : i32
    %c0_i32_1 = arith.constant 0 : i32
    return %c0_i32, %c0_i32_0 : i32, i32
  }
  func.func @transform_3(%arg0: i32) -> (i32, i32) {
    %c0_i32 = arith.constant 0 : i32
    %c0_i32_0 = arith.constant 0 : i32
    %c0_i32_1 = arith.constant 0 : i32
    return %c0_i32, %c0_i32_0 : i32, i32
  }
  func.func @transform_4(%arg0: i32) -> (i32, i32) {
    %c0_i32 = arith.constant 0 : i32
    %c0_i32_0 = arith.constant 0 : i32
    %c0_i32_1 = arith.constant 0 : i32
    return %c0_i32, %c0_i32_0 : i32, i32
  }
  func.func @transform_5(%arg0: i32) -> (i32, i32) {
    %c0_i32 = arith.constant 0 : i32
    %c0_i32_0 = arith.constant 0 : i32
    %c0_i32_1 = arith.constant 0 : i32
    return %c0_i32, %c0_i32_0 : i32, i32
  }
  func.func @transform_6(%arg0: i32) -> (i32, i32) {
    %c0_i32 = arith.constant 0 : i32
    %c0_i32_0 = arith.constant 0 : i32
    %c0_i32_1 = arith.constant 0 : i32
    return %c0_i32, %c0_i32_0 : i32, i32
  }
  func.func @transform_7(%arg0: i32) -> (i32, i32) {
    %c0_i32 = arith.constant 0 : i32
    %c0_i32_0 = arith.constant 0 : i32
    %c0_i32_1 = arith.constant 0 : i32
    return %c0_i32, %c0_i32_0 : i32, i32
  }
  func.func @transform_8(%arg0: i32) -> (i32, i32) {
    %c0_i32 = arith.constant 0 : i32
    %c0_i32_0 = arith.constant 0 : i32
    %c0_i32_1 = arith.constant 0 : i32
    return %c0_i32, %c0_i32_0 : i32, i32
  }
  func.func @transform_9(%arg0: i32) -> (i32, i32, i32) {
    %c0_i32 = arith.constant 0 : i32
    %c0_i32_0 = arith.constant 0 : i32
    %c0_i32_1 = arith.constant 0 : i32
    return %arg0, %c0_i32, %c0_i32_0 : i32, i32, i32
  }
  func.func @transform_10(%arg0: i32) -> (i32, i32, i32) {
    %c0_i32 = arith.constant 0 : i32
    %c0_i32_0 = arith.constant 0 : i32
    %c0_i32_1 = arith.constant 0 : i32
    return %arg0, %c0_i32, %c0_i32_0 : i32, i32, i32
  }
}

</mosaic_0001>

<llo_original>
// kernel: insta_model_forward.1
$region0: #{insta_model_forward.1}
  #allocation0 [shape = 'u32[]', space=smem, size = 0x4, offset = 0x4, fixed_abs, tag = 'smem constant byte address 0x4 - core index']
  #allocation1 [shape = 'u32[144,128]{1,0:T(1,128)}', space=vmem, size = 0x12000, scoped, tag = 'internal scratch']
  %s0 = inlined_call_operand.vmem [shape: f32[2,196,27], index: 0, kind: input, shape index: {}]
  %s1 = inlined_call_operand.vmem [shape: f32[2,1,4], index: 1, kind: input, shape index: {}]
  %s2 = inlined_call_operand.vmem [shape: f32[27,16], index: 2, kind: input, shape index: {}]
  %s3 = inlined_call_operand.vmem [shape: f32[1,8], index: 3, kind: input, shape index: {}]
  %s4 = inlined_call_operand.vmem [shape: f32[8,2], index: 4, kind: input, shape index: {}]
  %s5 = inlined_call_operand.vmem [shape: f32[1,2], index: 5, kind: input, shape index: {}]
  %s6 = inlined_call_operand.vmem [shape: f32[1,8], index: 6, kind: input, shape index: {}]
  %s7 = inlined_call_operand.vmem [shape: f32[8,10], index: 7, kind: input, shape index: {}]
  %s8 = inlined_call_operand.vmem [shape: f32[1,10], index: 8, kind: input, shape index: {}]
  %s9 = inlined_call_operand.hbm [shape: f32[2,1,10], index: 9, kind: output, shape index: {0}]
  %s10 = inlined_call_operand.hbm [shape: f32[2,1,2], index: 10, kind: output, shape index: {1}]
  %11 = xla_tuple %s9, %s10
  %s12 = sld [smem:[#allocation0]]
  $region77: #{insta_model_forward.1} parent=0
    _
  %s14 = ssub.s32 1, %s12
  %s15 = scalar_select 0, %s14, %s12
  $region1: #{insta_model_forward.1} parent=0
    #allocation2 [shape = 'u8[1024]{0}', space=vmem, size = 0x400, scoped, tag = 'output window, operand 0']
    #allocation3 [shape = 's32[2]{0}', space=sflag, size = 0x8, scoped, tag = 'scoped memory for insta_model_forward.1']
    #allocation4 [shape = 'u8[1024]{0}', space=vmem, size = 0x400, scoped, tag = 'output window, operand 1']
    #allocation5 [shape = 's32[2]{0}', space=sflag, size = 0x8, scoped, tag = 'scoped memory for insta_model_forward.1']
    %16 = vsyncpa [#allocation3], 0
    %s17 = scalar_lea.sflag [#allocation3], 1
    %18 = vsyncpa %s17, 0
    %19 = vsyncpa [#allocation5], 0
    %s20 = scalar_lea.sflag [#allocation5], 1
    %21 = vsyncpa %s20, 0
    loop: start=0, step=1, limit=4
    $region2: #{insta_model_forward.1} parent=1 // loop_pre_header
      _
    $region3: #{insta_model_forward.1} parent=1 // loop_header
      %s23 = sphi 0, %s27
      %p24 = scmp.ge.s32.totalorder %s23, 4
      %s33 = sphi 0, %s35
      %s36 = sphi 0, %s33
      %s37 = sphi 0, %s36
      %s53 = sphi 0, %s37
      %s59 = sphi 0, %s61
      %s62 = sphi 0, %s59
      %s63 = sphi 0, %s62
      %s79 = sphi 0, %s63
      %s83 = sphi 0, %s83
      %s85 = sphi 0, %s83
      %s86 = sphi 0, %s85
      %s100 = sphi 0, %s86
      %s104 = sphi 0, %s104
      %s106 = sphi 0, %s104
      %s107 = sphi 0, %s106
      %s121 = sphi 0, %s107
      %s125 = sphi 0, %s125
      %s127 = sphi 0, %s125
      %s128 = sphi 0, %s127
      %s142 = sphi 0, %s128
      %s146 = sphi 0, %s146
      %s148 = sphi 0, %s146
      %s149 = sphi 0, %s148
      %s163 = sphi 0, %s149
      %s167 = sphi 0, %s167
      %s169 = sphi 0, %s167
      %s170 = sphi 0, %s169
      %s184 = sphi 0, %s170
      %s188 = sphi 0, %s188
      %s190 = sphi 0, %s188
      %s191 = sphi 0, %s190
      %s205 = sphi 0, %s191
      %s209 = sphi 0, %s209
      %s211 = sphi 0, %s209
      %s212 = sphi 0, %s211
      %s226 = sphi 0, %s212
      %s232 = sphi 0, %s234
      %s235 = sphi 0, %s232
      %s236 = sphi 0, %s235
      %s252 = sphi 0, %s236
      %s258 = sphi 0, %s260
      %s261 = sphi 0, %s258
      %s262 = sphi 0, %s261
      %s278 = sphi 0, %s262
    $region4: #{insta_model_forward.1} parent=1 // loop_header_branch
      %26 = sbr.rel (%p24) target = $region8
    $region5: #{insta_model_forward.1} parent=1 // loop_body
      %s28 = ssub.s32 %s23, 1
      %s29 = ssub.s32 %s23, 2
      %s30 = sadd.s32 %s23, 1
      %s31 = ssub.s32 %s23, %s30
      %p32 = scmp.eq.s32.totalorder %s31, 0
      %s34 = sadd.s32 %s33, 1
      %s35 = scalar_select %p32, %s33, %s34
      %p38 = pneg %p32
      %p39 = scmp.eq.s32.totalorder %s23, 1
      %p40 = por %p38, %p39
      %p41 = scmp.ne.s32.totalorder %s33, %s36
      %p42 = scmp.eq.s32.totalorder %s23, 0
      %p43 = por %p41, %p42
      %p44 = scmp.ne.s32.totalorder %s33, %s36
      %p45 = scmp.eq.s32.totalorder %s28, 1
      %p46 = por %p44, %p45
      %p47 = scmp.ne.s32.totalorder %s36, %s37
      %p48 = scmp.eq.s32.totalorder %s28, 0
      %p49 = por %p47, %p48
      %p50 = scmp.ne.s32.totalorder %s36, %s37
      %p51 = scmp.eq.s32.totalorder %s29, 1
      %p52 = por %p50, %p51
      %p54 = scmp.ne.s32.totalorder %s37, %s53
      %p55 = scmp.eq.s32.totalorder %s29, 0
      %p56 = por %p54, %p55
      %s57 = ssub.s32 %s23, %s30
      %p58 = scmp.eq.s32.totalorder %s57, 0
      %s60 = sadd.s32 %s59, 1
      %s61 = scalar_select %p58, %s59, %s60
      %p64 = pneg %p58
      %p65 = scmp.eq.s32.totalorder %s23, 1
      %p66 = por %p64, %p65
      %p67 = scmp.ne.s32.totalorder %s59, %s62
      %p68 = scmp.eq.s32.totalorder %s23, 0
      %p69 = por %p67, %p68
      %p70 = scmp.ne.s32.totalorder %s59, %s62
      %p71 = scmp.eq.s32.totalorder %s28, 1
      %p72 = por %p70, %p71
      %p73 = scmp.ne.s32.totalorder %s62, %s63
      %p74 = scmp.eq.s32.totalorder %s28, 0
      %p75 = por %p73, %p74
      %p76 = scmp.ne.s32.totalorder %s62, %s63
      %p77 = scmp.eq.s32.totalorder %s29, 1
      %p78 = por %p76, %p77
      %p80 = scmp.ne.s32.totalorder %s63, %s79
      %p81 = scmp.eq.s32.totalorder %s29, 0
      %p82 = por %p80, %p81
      %s84 = sadd.s32 %s83, 1
      %p87 = scmp.eq.s32.totalorder %s23, 1
      %p88 = scmp.ne.s32.totalorder %s83, %s85
      %p89 = scmp.eq.s32.totalorder %s23, 0
      %p90 = por %p88, %p89
      %p91 = scmp.ne.s32.totalorder %s83, %s85
      %p92 = scmp.eq.s32.totalorder %s28, 1
      %p93 = por %p91, %p92
      %p94 = scmp.ne.s32.totalorder %s85, %s86
      %p95 = scmp.eq.s32.totalorder %s28, 0
      %p96 = por %p94, %p95
      %p97 = scmp.ne.s32.totalorder %s85, %s86
      %p98 = scmp.eq.s32.totalorder %s29, 1
      %p99 = por %p97, %p98
      %p101 = scmp.ne.s32.totalorder %s86, %s100
      %p102 = scmp.eq.s32.totalorder %s29, 0
      %p103 = por %p101, %p102
      %s105 = sadd.s32 %s104, 1
      %p108 = scmp.eq.s32.totalorder %s23, 1
      %p109 = scmp.ne.s32.totalorder %s104, %s106
      %p110 = scmp.eq.s32.totalorder %s23, 0
      %p111 = por %p109, %p110
      %p112 = scmp.ne.s32.totalorder %s104, %s106
      %p113 = scmp.eq.s32.totalorder %s28, 1
      %p114 = por %p112, %p113
      %p115 = scmp.ne.s32.totalorder %s106, %s107
      %p116 = scmp.eq.s32.totalorder %s28, 0
      %p117 = por %p115, %p116
      %p118 = scmp.ne.s32.totalorder %s106, %s107
      %p119 = scmp.eq.s32.totalorder %s29, 1
      %p120 = por %p118, %p119
      %p122 = scmp.ne.s32.totalorder %s107, %s121
      %p123 = scmp.eq.s32.totalorder %s29, 0
      %p124 = por %p122, %p123
      %s126 = sadd.s32 %s125, 1
      %p129 = scmp.eq.s32.totalorder %s23, 1
      %p130 = scmp.ne.s32.totalorder %s125, %s127
      %p131 = scmp.eq.s32.totalorder %s23, 0
      %p132 = por %p130, %p131
      %p133 = scmp.ne.s32.totalorder %s125, %s127
      %p134 = scmp.eq.s32.totalorder %s28, 1
      %p135 = por %p133, %p134
      %p136 = scmp.ne.s32.totalorder %s127, %s128
      %p137 = scmp.eq.s32.totalorder %s28, 0
      %p138 = por %p136, %p137
      %p139 = scmp.ne.s32.totalorder %s127, %s128
      %p140 = scmp.eq.s32.totalorder %s29, 1
      %p141 = por %p139, %p140
      %p143 = scmp.ne.s32.totalorder %s128, %s142
      %p144 = scmp.eq.s32.totalorder %s29, 0
      %p145 = por %p143, %p144
      %s147 = sadd.s32 %s146, 1
      %p150 = scmp.eq.s32.totalorder %s23, 1
      %p151 = scmp.ne.s32.totalorder %s146, %s148
      %p152 = scmp.eq.s32.totalorder %s23, 0
      %p153 = por %p151, %p152
      %p154 = scmp.ne.s32.totalorder %s146, %s148
      %p155 = scmp.eq.s32.totalorder %s28, 1
      %p156 = por %p154, %p155
      %p157 = scmp.ne.s32.totalorder %s148, %s149
      %p158 = scmp.eq.s32.totalorder %s28, 0
      %p159 = por %p157, %p158
      %p160 = scmp.ne.s32.totalorder %s148, %s149
      %p161 = scmp.eq.s32.totalorder %s29, 1
      %p162 = por %p160, %p161
      %p164 = scmp.ne.s32.totalorder %s149, %s163
      %p165 = scmp.eq.s32.totalorder %s29, 0
      %p166 = por %p164, %p165
      %s168 = sadd.s32 %s167, 1
      %p171 = scmp.eq.s32.totalorder %s23, 1
      %p172 = scmp.ne.s32.totalorder %s167, %s169
      %p173 = scmp.eq.s32.totalorder %s23, 0
      %p174 = por %p172, %p173
      %p175 = scmp.ne.s32.totalorder %s167, %s169
      %p176 = scmp.eq.s32.totalorder %s28, 1
      %p177 = por %p175, %p176
      %p178 = scmp.ne.s32.totalorder %s169, %s170
      %p179 = scmp.eq.s32.totalorder %s28, 0
      %p180 = por %p178, %p179
      %p181 = scmp.ne.s32.totalorder %s169, %s170
      %p182 = scmp.eq.s32.totalorder %s29, 1
      %p183 = por %p181, %p182
      %p185 = scmp.ne.s32.totalorder %s170, %s184
      %p186 = scmp.eq.s32.totalorder %s29, 0
      %p187 = por %p185, %p186
      %s189 = sadd.s32 %s188, 1
      %p192 = scmp.eq.s32.totalorder %s23, 1
      %p193 = scmp.ne.s32.totalorder %s188, %s190
      %p194 = scmp.eq.s32.totalorder %s23, 0
      %p195 = por %p193, %p194
      %p196 = scmp.ne.s32.totalorder %s188, %s190
      %p197 = scmp.eq.s32.totalorder %s28, 1
      %p198 = por %p196, %p197
      %p199 = scmp.ne.s32.totalorder %s190, %s191
      %p200 = scmp.eq.s32.totalorder %s28, 0
      %p201 = por %p199, %p200
      %p202 = scmp.ne.s32.totalorder %s190, %s191
      %p203 = scmp.eq.s32.totalorder %s29, 1
      %p204 = por %p202, %p203
      %p206 = scmp.ne.s32.totalorder %s191, %s205
      %p207 = scmp.eq.s32.totalorder %s29, 0
      %p208 = por %p206, %p207
      %s210 = sadd.s32 %s209, 1
      %p213 = scmp.eq.s32.totalorder %s23, 1
      %p214 = scmp.ne.s32.totalorder %s209, %s211
      %p215 = scmp.eq.s32.totalorder %s23, 0
      %p216 = por %p214, %p215
      %p217 = scmp.ne.s32.totalorder %s209, %s211
      %p218 = scmp.eq.s32.totalorder %s28, 1
      %p219 = por %p217, %p218
      %p220 = scmp.ne.s32.totalorder %s211, %s212
      %p221 = scmp.eq.s32.totalorder %s28, 0
      %p222 = por %p220, %p221
      %p223 = scmp.ne.s32.totalorder %s211, %s212
      %p224 = scmp.eq.s32.totalorder %s29, 1
      %p225 = por %p223, %p224
      %p227 = scmp.ne.s32.totalorder %s212, %s226
      %p228 = scmp.eq.s32.totalorder %s29, 0
      %p229 = por %p227, %p228
      %s230 = ssub.s32 %s23, %s30
      %p231 = scmp.eq.s32.totalorder %s230, 0
      %s233 = sadd.s32 %s232, 1
      %s234 = scalar_select %p231, %s232, %s233
      %p237 = pneg %p231
      %p238 = scmp.eq.s32.totalorder %s23, 1
      %p239 = por %p237, %p238
      %p240 = scmp.ne.s32.totalorder %s232, %s235
      %p241 = scmp.eq.s32.totalorder %s23, 0
      %p242 = por %p240, %p241
      %p243 = scmp.ne.s32.totalorder %s232, %s235
      %p244 = scmp.eq.s32.totalorder %s28, 1
      %p245 = por %p243, %p244
      %p246 = scmp.ne.s32.totalorder %s235, %s236
      %p247 = scmp.eq.s32.totalorder %s28, 0
      %p248 = por %p246, %p247
      %p249 = scmp.ne.s32.totalorder %s235, %s236
      %p250 = scmp.eq.s32.totalorder %s29, 1
      %p251 = por %p249, %p250
      %p253 = scmp.ne.s32.totalorder %s236, %s252
      %p254 = scmp.eq.s32.totalorder %s29, 0
      %p255 = por %p253, %p254
      %s256 = ssub.s32 %s23, %s30
      %p257 = scmp.eq.s32.totalorder %s256, 0
      %s259 = sadd.s32 %s258, 1
      %s260 = scalar_select %p257, %s258, %s259
      %p263 = pneg %p257
      %p264 = scmp.eq.s32.totalorder %s23, 1
      %p265 = por %p263, %p264
      %p266 = scmp.ne.s32.totalorder %s258, %s261
      %p267 = scmp.eq.s32.totalorder %s23, 0
      %p268 = por %p266, %p267
      %p269 = scmp.ne.s32.totalorder %s258, %s261
      %p270 = scmp.eq.s32.totalorder %s28, 1
      %p271 = por %p269, %p270
      %p272 = scmp.ne.s32.totalorder %s261, %s262
      %p273 = scmp.eq.s32.totalorder %s28, 0
      %p274 = por %p272, %p273
      %p275 = scmp.ne.s32.totalorder %s261, %s262
      %p276 = scmp.eq.s32.totalorder %s29, 1
      %p277 = por %p275, %p276
      %p279 = scmp.ne.s32.totalorder %s262, %s278
      %p280 = scmp.eq.s32.totalorder %s29, 0
      %p281 = por %p279, %p280
      %p282 = scmp.le.s32.totalorder 1, %s23
      %p283 = scmp.lt.s32.totalorder %s23, 3
      %p284 = pnand %p282, %p283
      %p285 = pneg %p284
      // Predicated region
      $region9: #{insta_model_forward.1} parent=5 // pred_check
        _
      $region10: #{insta_model_forward.1} parent=5 // pred_check_branch
        %287 = sbr.rel (%p284) target = $region12
      $region11: #{insta_model_forward.1} parent=5 // pred_region
        %s288 = ssub.s32 %s23, 1
        // Predicated region
        $region13: #{insta_model_forward.1} parent=11 // pred_check
          %p289 = pneg %p96
        $region14: #{insta_model_forward.1} parent=11 // pred_check_branch
          %291 = sbr.rel (%p289) target = $region16
        $region15: #{insta_model_forward.1} parent=11 // pred_region
          _
        $region16: #{insta_model_forward.1} parent=11 // pred_fallthru
          _
        // Predicated region
        $region17: #{insta_model_forward.1} parent=11 // pred_check
          %p292 = pneg %p117
        $region18: #{insta_model_forward.1} parent=11 // pred_check_branch
          %294 = sbr.rel (%p292) target = $region20
        $region19: #{insta_model_forward.1} parent=11 // pred_region
          _
        $region20: #{insta_model_forward.1} parent=11 // pred_fallthru
          _
        // Predicated region
        $region21: #{insta_model_forward.1} parent=11 // pred_check
          %p295 = pneg %p138
        $region22: #{insta_model_forward.1} parent=11 // pred_check_branch
          %297 = sbr.rel (%p295) target = $region24
        $region23: #{insta_model_forward.1} parent=11 // pred_region
          _
        $region24: #{insta_model_forward.1} parent=11 // pred_fallthru
          _
        // Predicated region
        $region25: #{insta_model_forward.1} parent=11 // pred_check
          %p298 = pneg %p159
        $region26: #{insta_model_forward.1} parent=11 // pred_check_branch
          %300 = sbr.rel (%p298) target = $region28
        $region27: #{insta_model_forward.1} parent=11 // pred_region
          _
        $region28: #{insta_model_forward.1} parent=11 // pred_fallthru
          _
        // Predicated region
        $region29: #{insta_model_forward.1} parent=11 // pred_check
          %p301 = pneg %p180
        $region30: #{insta_model_forward.1} parent=11 // pred_check_branch
          %303 = sbr.rel (%p301) target = $region32
        $region31: #{insta_model_forward.1} parent=11 // pred_region
          _
        $region32: #{insta_model_forward.1} parent=11 // pred_fallthru
          _
        // Predicated region
        $region33: #{insta_model_forward.1} parent=11 // pred_check
          %p304 = pneg %p201
        $region34: #{insta_model_forward.1} parent=11 // pred_check_branch
          %306 = sbr.rel (%p304) target = $region36
        $region35: #{insta_model_forward.1} parent=11 // pred_region
          _
        $region36: #{insta_model_forward.1} parent=11 // pred_fallthru
          _
        // Predicated region
        $region37: #{insta_model_forward.1} parent=11 // pred_check
          %p307 = pneg %p222
        $region38: #{insta_model_forward.1} parent=11 // pred_check_branch
          %309 = sbr.rel (%p307) target = $region40
        $region39: #{insta_model_forward.1} parent=11 // pred_region
          _
        $region40: #{insta_model_forward.1} parent=11 // pred_fallthru
          _
      $region12: #{insta_model_forward.1} parent=5 // pred_fallthru
        _
      %p310 = scmp.lt.s32.totalorder %s23, 2
      // Predicated region
      $region41: #{insta_model_forward.1} parent=5 // pred_check
        %p311 = pneg %p310
      $region42: #{insta_model_forward.1} parent=5 // pred_check_branch
        %313 = sbr.rel (%p311) target = $region44
      $region43: #{insta_model_forward.1} parent=5 // pred_region
        // Predicated region
        $region45: #{insta_model_forward.1} parent=43 // pred_check
          %p314 = pneg %p43
        $region46: #{insta_model_forward.1} parent=43 // pred_check_branch
          %316 = sbr.rel (%p314) target = $region48
        $region47: #{insta_model_forward.1} parent=43 // pred_region
          %p317 = scmp.lt.s32.totalorder %s23, 1
          %s318 = scalar_select %p317, %s23, 1
          %s319 = smul.addr %s318, 25
          %s320 = smul.addr %s319, 8
          %s321 = scalar_lea.vmem %s0, %s320
        $region48: #{insta_model_forward.1} parent=43 // pred_fallthru
          _
        // Predicated region
        $region49: #{insta_model_forward.1} parent=43 // pred_check
          %p322 = pneg %p69
        $region50: #{insta_model_forward.1} parent=43 // pred_check_branch
          %324 = sbr.rel (%p322) target = $region52
        $region51: #{insta_model_forward.1} parent=43 // pred_region
          %p325 = scmp.lt.s32.totalorder %s23, 1
          %s326 = scalar_select %p325, %s23, 1
          %s327 = scalar_lea.vmem %s1, %s326
        $region52: #{insta_model_forward.1} parent=43 // pred_fallthru
          _
      $region44: #{insta_model_forward.1} parent=5 // pred_fallthru
        _
      %p328 = scmp.le.s32.totalorder 1, %s23
      %p329 = scmp.lt.s32.totalorder %s23, 3
      %p330 = pnand %p328, %p329
      %p331 = pneg %p330
      // Predicated region
      $region53: #{insta_model_forward.1} parent=5 // pred_check
        _
      $region54: #{insta_model_forward.1} parent=5 // pred_check_branch
        %333 = sbr.rel (%p330) target = $region56
      $region55: #{insta_model_forward.1} parent=5 // pred_region
        %s334 = ssub.s32 %s23, 1
        %p335 = scmp.lt.s32.totalorder %s28, 1
        %s336 = scalar_select %p335, %s28, 1
        %s337 = smul.addr %s336, 25
        %s338 = smul.addr %s337, 8
        %s339 = scalar_lea.vmem %s0, %s338
        %p340 = pneg %p49
        %p341 = pneg %p46
        %p342 = scmp.lt.s32.totalorder %s28, 1
        %s343 = scalar_select %p342, %s28, 1
        %s344 = scalar_lea.vmem %s1, %s343
        %p345 = pneg %p75
        %p346 = pneg %p72
        %p347 = pneg %p96
        %p348 = pneg %p93
        %p349 = pneg %p117
        %p350 = pneg %p114
        %p351 = pneg %p138
        %p352 = pneg %p135
        %p353 = pneg %p159
        %p354 = pneg %p156
        %p355 = pneg %p180
        %p356 = pneg %p177
        %p357 = pneg %p201
        %p358 = pneg %p198
        %p359 = pneg %p222
        %p360 = pneg %p219
        %p361 = pneg %p248
        %p362 = pneg %p245
        %s363 = sand.u32 %s235, 1
        %s364 = scalar_lea.sflag [#allocation3], %s363
        %s365 = sand.u32 %s235, 1
        %s366 = scalar_lea.vmem [#allocation2], %s365
        %p367 = pneg %p274
        %p368 = pneg %p271
        %s369 = sand.u32 %s261, 1
        %s370 = scalar_lea.sflag [#allocation5], %s369
        %s371 = sand.u32 %s261, 1
        %s372 = scalar_lea.vmem [#allocation4], %s371
        %p373 = scmp.lt.s32.totalorder %s28, 1
        %s374 = scalar_select %p373, %s28, 1
        %s375 = smul.addr %s374, 25
        %s376 = smul.addr %s375, 8
        %s377 = scalar_lea.vmem %s0, %s376
        %p378 = scmp.lt.s32.totalorder %s28, 1
        %s379 = scalar_select %p378, %s28, 1
        %s380 = scalar_lea.vmem %s1, %s379
        %v381 = vld [vmem:[%s377] sm:$0xff]
        %v382 = vld [vmem:[%s377 + $0x8] sm:$0xff]
        %v383 = vld [vmem:[%s377 + $0x10] sm:$0xff]
        %v384 = vld [vmem:[%s377 + $0x18] sm:$0xff]
        %v385 = vld [vmem:[%s377 + $0x20] sm:$0xff]
        %v386 = vld [vmem:[%s377 + $0x28] sm:$0xff]
        %v387 = vld [vmem:[%s377 + $0x30] sm:$0xff]
        %v388 = vld [vmem:[%s377 + $0x38] sm:$0xff]
        %v389 = vld [vmem:[%s377 + $0x40] sm:$0xff]
        %v390 = vld [vmem:[%s377 + $0x48] sm:$0xff]
        %v391 = vld [vmem:[%s377 + $0x50] sm:$0xff]
        %v392 = vld [vmem:[%s377 + $0x58] sm:$0xff]
        %v393 = vld [vmem:[%s377 + $0x60] sm:$0xff]
        %v394 = vld [vmem:[%s377 + $0x68] sm:$0xff]
        %v395 = vld [vmem:[%s377 + $0x70] sm:$0xff]
        %v396 = vld [vmem:[%s377 + $0x78] sm:$0xff]
        %v397 = vld [vmem:[%s377 + $0x80] sm:$0xff]
        %v398 = vld [vmem:[%s377 + $0x88] sm:$0xff]
        %v399 = vld [vmem:[%s377 + $0x90] sm:$0xff]
        %v400 = vld [vmem:[%s377 + $0x98] sm:$0xff]
        %v401 = vld [vmem:[%s377 + $0xa0] sm:$0xff]
        %v402 = vld [vmem:[%s377 + $0xa8] sm:$0xff]
        %v403 = vld [vmem:[%s377 + $0xb0] sm:$0xff]
        %v404 = vld [vmem:[%s377 + $0xb8] sm:$0xff]
        %v405 = vld [vmem:[%s377 + $0xc0] sm:$0xf]
        %v406 = vld [vmem:[%s2] sm:$0xff]
        %v407 = vld [vmem:[%s2 + $0x8] sm:$0xff]
        %v408 = vld [vmem:[%s2 + $0x10] sm:$0xff]
        %v409 = vld [vmem:[%s2 + $0x18] sm:$0x7]
        %vm410 = vcmask 220160
        %v412 = vsel %vm410, %v381, 0
        %v415 = vsel %vm410, %v382, 0
        %v418 = vsel %vm410, %v383, 0
        %v421 = vsel %vm410, %v384, 0
        %v424 = vsel %vm410, %v385, 0
        %v427 = vsel %vm410, %v386, 0
        %v430 = vsel %vm410, %v387, 0
        %v433 = vsel %vm410, %v388, 0
        %v436 = vsel %vm410, %v389, 0
        %v439 = vsel %vm410, %v390, 0
        %v442 = vsel %vm410, %v391, 0
        %v445 = vsel %vm410, %v392, 0
        %v448 = vsel %vm410, %v393, 0
        %v451 = vsel %vm410, %v394, 0
        %v454 = vsel %vm410, %v395, 0
        %v457 = vsel %vm410, %v396, 0
        %v460 = vsel %vm410, %v397, 0
        %v463 = vsel %vm410, %v398, 0
        %v466 = vsel %vm410, %v399, 0
        %v469 = vsel %vm410, %v400, 0
        %v472 = vsel %vm410, %v401, 0
        %v475 = vsel %vm410, %v402, 0
        %v478 = vsel %vm410, %v403, 0
        %v481 = vsel %vm410, %v404, 0
        %v484 = vsel %vm410, %v405, 0
        %vm486 = vcmask 1042432
        %v488 = vsel %vm486, %v409, 0
        %490 = vmatprep.subr.mxu0 0.0
        %491 = vmatpush1.msra.mxu0 0.0
        %492 = vmatprep.subr.mxu0 0.0
        %493 = vmatpush1.msra.mxu0 0.0
        %494 = vmatprep.subr.mxu0 0.0
        %495 = vmatpush1.msra.mxu0 0.0
        %496 = vmatprep.subr.mxu0 0.0
        %497 = vmatpush1.msra.mxu0 0.0
        %498 = vmatprep.subr.mxu0 0.0
        %499 = vmatpush1.msra.mxu0 0.0
        %500 = vmatprep.subr.mxu0 0.0
        %501 = vmatpush1.msra.mxu0 0.0
        %502 = vmatprep.subr.mxu0 0.0
        %503 = vmatpush1.msra.mxu0 0.0
        %504 = vmatprep.subr.mxu0 0.0
        %505 = vmatpush1.msra.mxu0 0.0
        %506 = vmatprep.subr.mxu0 0.0
        %507 = vmatpush1.msra.mxu0 0.0
        %508 = vmatprep.subr.mxu0 0.0
        %509 = vmatpush1.msra.mxu0 0.0
        %510 = vmatprep.subr.mxu0 0.0
        %511 = vmatpush1.msra.mxu0 0.0
        %512 = vmatprep.subr.mxu0 0.0
        %513 = vmatpush1.msra.mxu0 0.0
        %514 = vmatprep.subr.mxu0 0.0
        %515 = vmatpush1.msra.mxu0 %v488
        %516 = vmatprep.subr.mxu0 0.0
        %517 = vmatpush1.msra.mxu0 %v408
        %518 = vmatprep.subr.mxu0 0.0
        %519 = vmatpush1.msra.mxu0 %v407
        %520 = vmatprep.subr.mxu0 0.0
        %521 = vmatpush1.msra.mxu0 %v406
        %522 = vmatprep.subr.mxu0 0.0
        %523 = vmatpush2.msra.mxu0 0.0
        %524 = vmatprep.subr.mxu0 0.0
        %525 = vmatpush2.msra.mxu0 0.0
        %526 = vmatprep.subr.mxu0 0.0
        %527 = vmatpush2.msra.mxu0 0.0
        %528 = vmatprep.subr.mxu0 0.0
        %529 = vmatpush2.msra.mxu0 0.0
        %530 = vmatprep.subr.mxu0 0.0
        %531 = vmatpush2.msra.mxu0 0.0
        %532 = vmatprep.subr.mxu0 0.0
        %533 = vmatpush2.msra.mxu0 0.0
        %534 = vmatprep.subr.mxu0 0.0
        %535 = vmatpush2.msra.mxu0 0.0
        %536 = vmatprep.subr.mxu0 0.0
        %537 = vmatpush2.msra.mxu0 0.0
        %538 = vmatprep.subr.mxu0 0.0
        %539 = vmatpush2.msra.mxu0 0.0
        %540 = vmatprep.subr.mxu0 0.0
        %541 = vmatpush2.msra.mxu0 0.0
        %542 = vmatprep.subr.mxu0 0.0
        %543 = vmatpush2.msra.mxu0 0.0
        %544 = vmatprep.subr.mxu0 0.0
        %545 = vmatpush2.msra.mxu0 0.0
        %546 = vmatprep.subr.mxu0 0.0
        %547 = vmatpush2.msra.mxu0 0.0
        %548 = vmatprep.subr.mxu0 0.0
        %549 = vmatpush2.msra.mxu0 0.0
        %550 = vmatprep.subr.mxu0 0.0
        %551 = vmatpush2.msra.mxu0 0.0
        %552 = vmatprep.subr.mxu0 0.0
        %553 = vmatpush2.msra.mxu0 0.0
        %554 = vmatprep.mubr.f32.mxu0 0.0
        %555 = vmatmul.mubr.f32.gmra.mxu0 %v412
        %v556 = vpop.f32.mrf.mxu0
        %v557 = vadd.f32 0.0, %v556
        %v558 = vpop.f32.mrf.mxu0
        %559 = vmatprep.mubr.f32.mxu0 0.0
        %560 = vmatmul.mubr.f32.gmra.mxu0 %v415
        %v561 = vpop.f32.mrf.mxu0
        %v562 = vadd.f32 0.0, %v561
        %v563 = vpop.f32.mrf.mxu0
        %564 = vmatprep.mubr.f32.mxu0 0.0
        %565 = vmatmul.mubr.f32.gmra.mxu0 %v418
        %v566 = vpop.f32.mrf.mxu0
        %v567 = vadd.f32 0.0, %v566
        %v568 = vpop.f32.mrf.mxu0
        %569 = vmatprep.mubr.f32.mxu0 0.0
        %570 = vmatmul.mubr.f32.gmra.mxu0 %v421
        %v571 = vpop.f32.mrf.mxu0
        %v572 = vadd.f32 0.0, %v571
        %v573 = vpop.f32.mrf.mxu0
        %574 = vmatprep.mubr.f32.mxu0 0.0
        %575 = vmatmul.mubr.f32.gmra.mxu0 %v424
        %v576 = vpop.f32.mrf.mxu0
        %v577 = vadd.f32 0.0, %v576
        %v578 = vpop.f32.mrf.mxu0
        %579 = vmatprep.mubr.f32.mxu0 0.0
        %580 = vmatmul.mubr.f32.gmra.mxu0 %v427
        %v581 = vpop.f32.mrf.mxu0
        %v582 = vadd.f32 0.0, %v581
        %v583 = vpop.f32.mrf.mxu0
        %584 = vmatprep.mubr.f32.mxu0 0.0
        %585 = vmatmul.mubr.f32.gmra.mxu0 %v430
        %v586 = vpop.f32.mrf.mxu0
        %v587 = vadd.f32 0.0, %v586
        %v588 = vpop.f32.mrf.mxu0
        %589 = vmatprep.mubr.f32.mxu0 0.0
        %590 = vmatmul.mubr.f32.gmra.mxu0 %v433
        %v591 = vpop.f32.mrf.mxu0
        %v592 = vadd.f32 0.0, %v591
        %v593 = vpop.f32.mrf.mxu0
        %594 = vmatprep.mubr.f32.mxu0 0.0
        %595 = vmatmul.mubr.f32.gmra.mxu0 %v436
        %v596 = vpop.f32.mrf.mxu0
        %v597 = vadd.f32 0.0, %v596
        %v598 = vpop.f32.mrf.mxu0
        %599 = vmatprep.mubr.f32.mxu0 0.0
        %600 = vmatmul.mubr.f32.gmra.mxu0 %v439
        %v601 = vpop.f32.mrf.mxu0
        %v602 = vadd.f32 0.0, %v601
        %v603 = vpop.f32.mrf.mxu0
        %604 = vmatprep.mubr.f32.mxu0 0.0
        %605 = vmatmul.mubr.f32.gmra.mxu0 %v442
        %v606 = vpop.f32.mrf.mxu0
        %v607 = vadd.f32 0.0, %v606
        %v608 = vpop.f32.mrf.mxu0
        %609 = vmatprep.mubr.f32.mxu0 0.0
        %610 = vmatmul.mubr.f32.gmra.mxu0 %v445
        %v611 = vpop.f32.mrf.mxu0
        %v612 = vadd.f32 0.0, %v611
        %v613 = vpop.f32.mrf.mxu0
        %614 = vmatprep.mubr.f32.mxu0 0.0
        %615 = vmatmul.mubr.f32.gmra.mxu0 %v448
        %v616 = vpop.f32.mrf.mxu0
        %v617 = vadd.f32 0.0, %v616
        %v618 = vpop.f32.mrf.mxu0
        %619 = vmatprep.mubr.f32.mxu0 0.0
        %620 = vmatmul.mubr.f32.gmra.mxu0 %v451
        %v621 = vpop.f32.mrf.mxu0
        %v622 = vadd.f32 0.0, %v621
        %v623 = vpop.f32.mrf.mxu0
        %624 = vmatprep.mubr.f32.mxu0 0.0
        %625 = vmatmul.mubr.f32.gmra.mxu0 %v454
        %v626 = vpop.f32.mrf.mxu0
        %v627 = vadd.f32 0.0, %v626
        %v628 = vpop.f32.mrf.mxu0
        %629 = vmatprep.mubr.f32.mxu0 0.0
        %630 = vmatmul.mubr.f32.gmra.mxu0 %v457
        %v631 = vpop.f32.mrf.mxu0
        %v632 = vadd.f32 0.0, %v631
        %v633 = vpop.f32.mrf.mxu0
        %634 = vmatprep.mubr.f32.mxu0 0.0
        %635 = vmatmul.mubr.f32.gmra.mxu0 %v460
        %v636 = vpop.f32.mrf.mxu0
        %v637 = vadd.f32 0.0, %v636
        %v638 = vpop.f32.mrf.mxu0
        %639 = vmatprep.mubr.f32.mxu0 0.0
        %640 = vmatmul.mubr.f32.gmra.mxu0 %v463
        %v641 = vpop.f32.mrf.mxu0
        %v642 = vadd.f32 0.0, %v641
        %v643 = vpop.f32.mrf.mxu0
        %644 = vmatprep.mubr.f32.mxu0 0.0
        %645 = vmatmul.mubr.f32.gmra.mxu0 %v466
        %v646 = vpop.f32.mrf.mxu0
        %v647 = vadd.f32 0.0, %v646
        %v648 = vpop.f32.mrf.mxu0
        %649 = vmatprep.mubr.f32.mxu0 0.0
        %650 = vmatmul.mubr.f32.gmra.mxu0 %v469
        %v651 = vpop.f32.mrf.mxu0
        %v652 = vadd.f32 0.0, %v651
        %v653 = vpop.f32.mrf.mxu0
        %654 = vmatprep.mubr.f32.mxu0 0.0
        %655 = vmatmul.mubr.f32.gmra.mxu0 %v472
        %v656 = vpop.f32.mrf.mxu0
        %v657 = vadd.f32 0.0, %v656
        %v658 = vpop.f32.mrf.mxu0
        %659 = vmatprep.mubr.f32.mxu0 0.0
        %660 = vmatmul.mubr.f32.gmra.mxu0 %v475
        %v661 = vpop.f32.mrf.mxu0
        %v662 = vadd.f32 0.0, %v661
        %v663 = vpop.f32.mrf.mxu0
        %664 = vmatprep.mubr.f32.mxu0 0.0
        %665 = vmatmul.mubr.f32.gmra.mxu0 %v478
        %v666 = vpop.f32.mrf.mxu0
        %v667 = vadd.f32 0.0, %v666
        %v668 = vpop.f32.mrf.mxu0
        %669 = vmatprep.mubr.f32.mxu0 0.0
        %670 = vmatmul.mubr.f32.gmra.mxu0 %v481
        %v671 = vpop.f32.mrf.mxu0
        %v672 = vadd.f32 0.0, %v671
        %v673 = vpop.f32.mrf.mxu0
        %674 = vmatprep.mubr.f32.mxu0 0.0
        %675 = vmatmul.mubr.f32.gmra.mxu0 %v484
        %v676 = vpop.f32.mrf.mxu0
        %v677 = vadd.f32 0.0, %v676
        %v678 = vpop.f32.mrf.mxu0
        %679 = vdwg.mxu0
        %v680 = vld [vmem:[%s3] sm:$0x1]
        %v682 = vlaneseq
        %v683 = vshrl.u32 %v682, 7
        %v684 = vsub.s32 0, %v683
        %v685 = vrot.slane %v680, %v684
        %v687 = vadd.f32 %v557, %v685
        %v688 = vadd.f32 %v562, %v685
        %v689 = vadd.f32 %v567, %v685
        %v690 = vadd.f32 %v572, %v685
        %v691 = vadd.f32 %v577, %v685
        %v692 = vadd.f32 %v582, %v685
        %v693 = vadd.f32 %v587, %v685
        %v694 = vadd.f32 %v592, %v685
        %v695 = vadd.f32 %v597, %v685
        %v696 = vadd.f32 %v602, %v685
        %v697 = vadd.f32 %v607, %v685
        %v698 = vadd.f32 %v612, %v685
        %v699 = vadd.f32 %v617, %v685
        %v700 = vadd.f32 %v622, %v685
        %v701 = vadd.f32 %v627, %v685
        %v702 = vadd.f32 %v632, %v685
        %v703 = vadd.f32 %v637, %v685
        %v704 = vadd.f32 %v642, %v685
        %v705 = vadd.f32 %v647, %v685
        %v706 = vadd.f32 %v652, %v685
        %v707 = vadd.f32 %v657, %v685
        %v708 = vadd.f32 %v662, %v685
        %v709 = vadd.f32 %v667, %v685
        %v710 = vadd.f32 %v672, %v685
        %v711 = vadd.f32 %v677, %v685
        %v712 = vmax.f32 %v687, 0.0
        %v713 = vmax.f32 %v688, 0.0
        %v714 = vmax.f32 %v689, 0.0
        %v715 = vmax.f32 %v690, 0.0
        %v716 = vmax.f32 %v691, 0.0
        %v717 = vmax.f32 %v692, 0.0
        %v718 = vmax.f32 %v693, 0.0
        %v719 = vmax.f32 %v694, 0.0
        %v720 = vmax.f32 %v695, 0.0
        %v721 = vmax.f32 %v696, 0.0
        %v722 = vmax.f32 %v697, 0.0
        %v723 = vmax.f32 %v698, 0.0
        %v724 = vmax.f32 %v699, 0.0
        %v725 = vmax.f32 %v700, 0.0
        %v726 = vmax.f32 %v701, 0.0
        %v727 = vmax.f32 %v702, 0.0
        %v728 = vmax.f32 %v703, 0.0
        %v729 = vmax.f32 %v704, 0.0
        %v730 = vmax.f32 %v705, 0.0
        %v731 = vmax.f32 %v706, 0.0
        %v732 = vmax.f32 %v707, 0.0
        %v733 = vmax.f32 %v708, 0.0
        %v734 = vmax.f32 %v709, 0.0
        %v735 = vmax.f32 %v710, 0.0
        %v736 = vmax.f32 %v711, 0.0
        %vm737 = vcmask 64512
        %v738 = vsel %vm737, %v712, 0.0
        %v739 = vsel %vm737, %v713, 0.0
        %v740 = vadd.f32 %v738, %v739
        %v741 = vsel %vm737, %v714, 0.0
        %v742 = vadd.f32 %v740, %v741
        %v743 = vsel %vm737, %v715, 0.0
        %v744 = vadd.f32 %v742, %v743
        %v745 = vsel %vm737, %v716, 0.0
        %v746 = vadd.f32 %v744, %v745
        %v747 = vsel %vm737, %v717, 0.0
        %v748 = vadd.f32 %v746, %v747
        %v749 = vsel %vm737, %v718, 0.0
        %v750 = vadd.f32 %v748, %v749
        %v751 = vsel %vm737, %v719, 0.0
        %v752 = vadd.f32 %v750, %v751
        %v753 = vsel %vm737, %v720, 0.0
        %v754 = vadd.f32 %v752, %v753
        %v755 = vsel %vm737, %v721, 0.0
        %v756 = vadd.f32 %v754, %v755
        %v757 = vsel %vm737, %v722, 0.0
        %v758 = vadd.f32 %v756, %v757
        %v759 = vsel %vm737, %v723, 0.0
        %v760 = vadd.f32 %v758, %v759
        %v761 = vsel %vm737, %v724, 0.0
        %v762 = vadd.f32 %v760, %v761
        %v763 = vsel %vm737, %v725, 0.0
        %v764 = vadd.f32 %v762, %v763
        %v765 = vsel %vm737, %v726, 0.0
        %v766 = vadd.f32 %v764, %v765
        %v767 = vsel %vm737, %v727, 0.0
        %v768 = vadd.f32 %v766, %v767
        %v769 = vsel %vm737, %v728, 0.0
        %v770 = vadd.f32 %v768, %v769
        %v771 = vsel %vm737, %v729, 0.0
        %v772 = vadd.f32 %v770, %v771
        %v773 = vsel %vm737, %v730, 0.0
        %v774 = vadd.f32 %v772, %v773
        %v775 = vsel %vm737, %v731, 0.0
        %v776 = vadd.f32 %v774, %v775
        %v777 = vsel %vm737, %v732, 0.0
        %v778 = vadd.f32 %v776, %v777
        %v779 = vsel %vm737, %v733, 0.0
        %v780 = vadd.f32 %v778, %v779
        %v781 = vsel %vm737, %v734, 0.0
        %v782 = vadd.f32 %v780, %v781
        %v783 = vsel %vm737, %v735, 0.0
        %v784 = vadd.f32 %v782, %v783
        %vm785 = vcmask 60416
        %v786 = vsel %vm785, %v736, 0.0
        %v787 = vadd.f32 %v784, %v786
        %v788 = vrot.slane %v787, 4
        %v789 = vadd.f32 %v787, %v788
        %v790 = vrot.slane %v789, 2
        %v791 = vadd.f32 %v789, %v790
        %v792 = vrot.slane %v791, 1
        %v793 = vadd.f32 %v791, %v792
        %v794 = vmul.f32 %v793, 0.0051020407
        %v795 = vld [vmem:[%s4] sm:$0xff]
        %v796 = vld [vmem:[%s5] sm:$0x1]
        %v798 = vsel %vm737, %v794, 0
        %800 = vmatprep.subr.mxu0 0.0
        %801 = vmatpush1.msra.mxu0 0.0
        %802 = vmatprep.subr.mxu0 0.0
        %803 = vmatpush1.msra.mxu0 0.0
        %804 = vmatprep.subr.mxu0 0.0
        %805 = vmatpush1.msra.mxu0 0.0
        %806 = vmatprep.subr.mxu0 0.0
        %807 = vmatpush1.msra.mxu0 0.0
        %808 = vmatprep.subr.mxu0 0.0
        %809 = vmatpush1.msra.mxu0 0.0
        %810 = vmatprep.subr.mxu0 0.0
        %811 = vmatpush1.msra.mxu0 0.0
        %812 = vmatprep.subr.mxu0 0.0
        %813 = vmatpush1.msra.mxu0 0.0
        %814 = vmatprep.subr.mxu0 0.0
        %815 = vmatpush1.msra.mxu0 0.0
        %816 = vmatprep.subr.mxu0 0.0
        %817 = vmatpush1.msra.mxu0 0.0
        %818 = vmatprep.subr.mxu0 0.0
        %819 = vmatpush1.msra.mxu0 0.0
        %820 = vmatprep.subr.mxu0 0.0
        %821 = vmatpush1.msra.mxu0 0.0
        %822 = vmatprep.subr.mxu0 0.0
        %823 = vmatpush1.msra.mxu0 0.0
        %824 = vmatprep.subr.mxu0 0.0
        %825 = vmatpush1.msra.mxu0 0.0
        %826 = vmatprep.subr.mxu0 0.0
        %827 = vmatpush1.msra.mxu0 0.0
        %828 = vmatprep.subr.mxu0 0.0
        %829 = vmatpush1.msra.mxu0 0.0
        %830 = vmatprep.subr.mxu0 0.0
        %831 = vmatpush1.msra.mxu0 %v795
        %832 = vmatprep.subr.mxu0 0.0
        %833 = vmatpush2.msra.mxu0 0.0
        %834 = vmatprep.subr.mxu0 0.0
        %835 = vmatpush2.msra.mxu0 0.0
        %836 = vmatprep.subr.mxu0 0.0
        %837 = vmatpush2.msra.mxu0 0.0
        %838 = vmatprep.subr.mxu0 0.0
        %839 = vmatpush2.msra.mxu0 0.0
        %840 = vmatprep.subr.mxu0 0.0
        %841 = vmatpush2.msra.mxu0 0.0
        %842 = vmatprep.subr.mxu0 0.0
        %843 = vmatpush2.msra.mxu0 0.0
        %844 = vmatprep.subr.mxu0 0.0
        %845 = vmatpush2.msra.mxu0 0.0
        %846 = vmatprep.subr.mxu0 0.0
        %847 = vmatpush2.msra.mxu0 0.0
        %848 = vmatprep.subr.mxu0 0.0
        %849 = vmatpush2.msra.mxu0 0.0
        %850 = vmatprep.subr.mxu0 0.0
        %851 = vmatpush2.msra.mxu0 0.0
        %852 = vmatprep.subr.mxu0 0.0
        %853 = vmatpush2.msra.mxu0 0.0
        %854 = vmatprep.subr.mxu0 0.0
        %855 = vmatpush2.msra.mxu0 0.0
        %856 = vmatprep.subr.mxu0 0.0
        %857 = vmatpush2.msra.mxu0 0.0
        %858 = vmatprep.subr.mxu0 0.0
        %859 = vmatpush2.msra.mxu0 0.0
        %860 = vmatprep.subr.mxu0 0.0
        %861 = vmatpush2.msra.mxu0 0.0
        %862 = vmatprep.subr.mxu0 0.0
        %863 = vmatpush2.msra.mxu0 0.0
        %864 = vmatprep.mubr.f32.mxu0 0.0
        %865 = vmatmul.mubr.f32.gmra.mxu0 %v798
        %v866 = vpop.f32.mrf.mxu0
        %v867 = vadd.f32 %v796, %v866
        %v868 = vpop.f32.mrf.mxu0
        %869 = vdwg.mxu0
        %vm870 = vcmask 8192
        %871 = vst.msk [vmem:[%s372] sm:$0x1] %vm870, %v867
        %v872 = vld [vmem:[%s380] sm:$0x1]
        %874 = vrot.lane.b32.xlu0 %v867, 1
        %v875 = vpop.permute.xlu0 %874
        %v877 = vsub.f32 %v867, %v875
        %879 = vset.pattern.permute.xlu0 1
        %880 = vperm.xlu0 %879, %v877
        %v881 = vpop.permute.xlu0 %880
        %v883 = vmul.f32 %v872, %v881
        %884 = vset.pattern.permute.xlu0 0
        %885 = vperm.xlu0 %884, %v867
        %v886 = vpop.permute.xlu0 %885
        %v888 = vadd.f32 %v886, %v883
        %s890 = vtos %v888
        %v891 = vstv %s890
        %v893 = vmul.f32 %v891, %v557
        %v894 = vmul.f32 %v891, %v562
        %v895 = vmul.f32 %v891, %v567
        %v896 = vmul.f32 %v891, %v572
        %v897 = vmul.f32 %v891, %v577
        %v898 = vmul.f32 %v891, %v582
        %v899 = vmul.f32 %v891, %v587
        %v900 = vmul.f32 %v891, %v592
        %v901 = vmul.f32 %v891, %v597
        %v902 = vmul.f32 %v891, %v602
        %v903 = vmul.f32 %v891, %v607
        %v904 = vmul.f32 %v891, %v612
        %v905 = vmul.f32 %v891, %v617
        %v906 = vmul.f32 %v891, %v622
        %v907 = vmul.f32 %v891, %v627
        %v908 = vmul.f32 %v891, %v632
        %v909 = vmul.f32 %v891, %v637
        %v910 = vmul.f32 %v891, %v642
        %v911 = vmul.f32 %v891, %v647
        %v912 = vmul.f32 %v891, %v652
        %v913 = vmul.f32 %v891, %v657
        %v914 = vmul.f32 %v891, %v662
        %v915 = vmul.f32 %v891, %v667
        %v916 = vmul.f32 %v891, %v672
        %v917 = vmul.f32 %v891, %v677
        %v918 = vld [vmem:[%s6] sm:$0x1]
        %v920 = vlaneseq
        %v921 = vshrl.u32 %v920, 7
        %v922 = vsub.s32 0, %v921
        %v923 = vrot.slane %v918, %v922
        %924 = vrot.lane.b32.xlu0 %v923, 8
        %v925 = vpop.permute.xlu0 %924
        %v927 = vadd.f32 %v893, %v925
        %v928 = vadd.f32 %v894, %v925
        %v929 = vadd.f32 %v895, %v925
        %v930 = vadd.f32 %v896, %v925
        %v931 = vadd.f32 %v897, %v925
        %v932 = vadd.f32 %v898, %v925
        %v933 = vadd.f32 %v899, %v925
        %v934 = vadd.f32 %v900, %v925
        %v935 = vadd.f32 %v901, %v925
        %v936 = vadd.f32 %v902, %v925
        %v937 = vadd.f32 %v903, %v925
        %v938 = vadd.f32 %v904, %v925
        %v939 = vadd.f32 %v905, %v925
        %v940 = vadd.f32 %v906, %v925
        %v941 = vadd.f32 %v907, %v925
        %v942 = vadd.f32 %v908, %v925
        %v943 = vadd.f32 %v909, %v925
        %v944 = vadd.f32 %v910, %v925
        %v945 = vadd.f32 %v911, %v925
        %v946 = vadd.f32 %v912, %v925
        %v947 = vadd.f32 %v913, %v925
        %v948 = vadd.f32 %v914, %v925
        %v949 = vadd.f32 %v915, %v925
        %v950 = vadd.f32 %v916, %v925
        %v951 = vadd.f32 %v917, %v925
        %v952 = vmax.f32 %v927, 0.0
        %v953 = vmax.f32 %v928, 0.0
        %v954 = vmax.f32 %v929, 0.0
        %v955 = vmax.f32 %v930, 0.0
        %v956 = vmax.f32 %v931, 0.0
        %v957 = vmax.f32 %v932, 0.0
        %v958 = vmax.f32 %v933, 0.0
        %v959 = vmax.f32 %v934, 0.0
        %v960 = vmax.f32 %v935, 0.0
        %v961 = vmax.f32 %v936, 0.0
        %v962 = vmax.f32 %v937, 0.0
        %v963 = vmax.f32 %v938, 0.0
        %v964 = vmax.f32 %v939, 0.0
        %v965 = vmax.f32 %v940, 0.0
        %v966 = vmax.f32 %v941, 0.0
        %v967 = vmax.f32 %v942, 0.0
        %v968 = vmax.f32 %v943, 0.0
        %v969 = vmax.f32 %v944, 0.0
        %v970 = vmax.f32 %v945, 0.0
        %v971 = vmax.f32 %v946, 0.0
        %v972 = vmax.f32 %v947, 0.0
        %v973 = vmax.f32 %v948, 0.0
        %v974 = vmax.f32 %v949, 0.0
        %v975 = vmax.f32 %v950, 0.0
        %v976 = vmax.f32 %v951, 0.0
        %v977 = vadd.f32 %v952, 0.0
        %v978 = vadd.f32 %v953, 0.0
        %v979 = vadd.f32 %v954, 0.0
        %v980 = vadd.f32 %v955, 0.0
        %v981 = vadd.f32 %v956, 0.0
        %v982 = vadd.f32 %v957, 0.0
        %v983 = vadd.f32 %v958, 0.0
        %v984 = vadd.f32 %v959, 0.0
        %v985 = vadd.f32 %v960, 0.0
        %v986 = vadd.f32 %v961, 0.0
        %v987 = vadd.f32 %v962, 0.0
        %v988 = vadd.f32 %v963, 0.0
        %v989 = vadd.f32 %v964, 0.0
        %v990 = vadd.f32 %v965, 0.0
        %v991 = vadd.f32 %v966, 0.0
        %v992 = vadd.f32 %v967, 0.0
        %v993 = vadd.f32 %v968, 0.0
        %v994 = vadd.f32 %v969, 0.0
        %v995 = vadd.f32 %v970, 0.0
        %v996 = vadd.f32 %v971, 0.0
        %v997 = vadd.f32 %v972, 0.0
        %v998 = vadd.f32 %v973, 0.0
        %v999 = vadd.f32 %v974, 0.0
        %v1000 = vadd.f32 %v975, 0.0
        %v1001 = vadd.f32 %v976, 0.0
        %1002 = vrot.lane.b32.xlu0 %v888, 127
        %v1003 = vpop.permute.xlu0 %1002
        %s1004 = vtos %v1003
        %v1005 = vstv %s1004
        %v1007 = vmul.f32 %v1005, %v557
        %v1008 = vmul.f32 %v1005, %v562
        %v1009 = vmul.f32 %v1005, %v567
        %v1010 = vmul.f32 %v1005, %v572
        %v1011 = vmul.f32 %v1005, %v577
        %v1012 = vmul.f32 %v1005, %v582
        %v1013 = vmul.f32 %v1005, %v587
        %v1014 = vmul.f32 %v1005, %v592
        %v1015 = vmul.f32 %v1005, %v597
        %v1016 = vmul.f32 %v1005, %v602
        %v1017 = vmul.f32 %v1005, %v607
        %v1018 = vmul.f32 %v1005, %v612
        %v1019 = vmul.f32 %v1005, %v617
        %v1020 = vmul.f32 %v1005, %v622
        %v1021 = vmul.f32 %v1005, %v627
        %v1022 = vmul.f32 %v1005, %v632
        %v1023 = vmul.f32 %v1005, %v637
        %v1024 = vmul.f32 %v1005, %v642
        %v1025 = vmul.f32 %v1005, %v647
        %v1026 = vmul.f32 %v1005, %v652
        %v1027 = vmul.f32 %v1005, %v657
        %v1028 = vmul.f32 %v1005, %v662
        %v1029 = vmul.f32 %v1005, %v667
        %v1030 = vmul.f32 %v1005, %v672
        %v1031 = vmul.f32 %v1005, %v677
        %v1032 = vadd.f32 %v1007, %v925
        %v1033 = vadd.f32 %v1008, %v925
        %v1034 = vadd.f32 %v1009, %v925
        %v1035 = vadd.f32 %v1010, %v925
        %v1036 = vadd.f32 %v1011, %v925
        %v1037 = vadd.f32 %v1012, %v925
        %v1038 = vadd.f32 %v1013, %v925
        %v1039 = vadd.f32 %v1014, %v925
        %v1040 = vadd.f32 %v1015, %v925
        %v1041 = vadd.f32 %v1016, %v925
        %v1042 = vadd.f32 %v1017, %v925
        %v1043 = vadd.f32 %v1018, %v925
        %v1044 = vadd.f32 %v1019, %v925
        %v1045 = vadd.f32 %v1020, %v925
        %v1046 = vadd.f32 %v1021, %v925
        %v1047 = vadd.f32 %v1022, %v925
        %v1048 = vadd.f32 %v1023, %v925
        %v1049 = vadd.f32 %v1024, %v925
        %v1050 = vadd.f32 %v1025, %v925
        %v1051 = vadd.f32 %v1026, %v925
        %v1052 = vadd.f32 %v1027, %v925
        %v1053 = vadd.f32 %v1028, %v925
        %v1054 = vadd.f32 %v1029, %v925
        %v1055 = vadd.f32 %v1030, %v925
        %v1056 = vadd.f32 %v1031, %v925
        %v1057 = vmax.f32 %v1032, 0.0
        %v1058 = vmax.f32 %v1033, 0.0
        %v1059 = vmax.f32 %v1034, 0.0
        %v1060 = vmax.f32 %v1035, 0.0
        %v1061 = vmax.f32 %v1036, 0.0
        %v1062 = vmax.f32 %v1037, 0.0
        %v1063 = vmax.f32 %v1038, 0.0
        %v1064 = vmax.f32 %v1039, 0.0
        %v1065 = vmax.f32 %v1040, 0.0
        %v1066 = vmax.f32 %v1041, 0.0
        %v1067 = vmax.f32 %v1042, 0.0
        %v1068 = vmax.f32 %v1043, 0.0
        %v1069 = vmax.f32 %v1044, 0.0
        %v1070 = vmax.f32 %v1045, 0.0
        %v1071 = vmax.f32 %v1046, 0.0
        %v1072 = vmax.f32 %v1047, 0.0
        %v1073 = vmax.f32 %v1048, 0.0
        %v1074 = vmax.f32 %v1049, 0.0
        %v1075 = vmax.f32 %v1050, 0.0
        %v1076 = vmax.f32 %v1051, 0.0
        %v1077 = vmax.f32 %v1052, 0.0
        %v1078 = vmax.f32 %v1053, 0.0
        %v1079 = vmax.f32 %v1054, 0.0
        %v1080 = vmax.f32 %v1055, 0.0
        %v1081 = vmax.f32 %v1056, 0.0
        %v1082 = vadd.f32 %v977, %v1057
        %v1083 = vadd.f32 %v978, %v1058
        %v1084 = vadd.f32 %v979, %v1059
        %v1085 = vadd.f32 %v980, %v1060
        %v1086 = vadd.f32 %v981, %v1061
        %v1087 = vadd.f32 %v982, %v1062
        %v1088 = vadd.f32 %v983, %v1063
        %v1089 = vadd.f32 %v984, %v1064
        %v1090 = vadd.f32 %v985, %v1065
        %v1091 = vadd.f32 %v986, %v1066
        %v1092 = vadd.f32 %v987, %v1067
        %v1093 = vadd.f32 %v988, %v1068
        %v1094 = vadd.f32 %v989, %v1069
        %v1095 = vadd.f32 %v990, %v1070
        %v1096 = vadd.f32 %v991, %v1071
        %v1097 = vadd.f32 %v992, %v1072
        %v1098 = vadd.f32 %v993, %v1073
        %v1099 = vadd.f32 %v994, %v1074
        %v1100 = vadd.f32 %v995, %v1075
        %v1101 = vadd.f32 %v996, %v1076
        %v1102 = vadd.f32 %v997, %v1077
        %v1103 = vadd.f32 %v998, %v1078
        %v1104 = vadd.f32 %v999, %v1079
        %v1105 = vadd.f32 %v1000, %v1080
        %v1106 = vadd.f32 %v1001, %v1081
        %1107 = vrot.lane.b32.xlu0 %v888, 126
        %v1108 = vpop.permute.xlu0 %1107
        %s1109 = vtos %v1108
        %v1110 = vstv %s1109
        %v1112 = vmul.f32 %v1110, %v557
        %v1113 = vmul.f32 %v1110, %v562
        %v1114 = vmul.f32 %v1110, %v567
        %v1115 = vmul.f32 %v1110, %v572
        %v1116 = vmul.f32 %v1110, %v577
        %v1117 = vmul.f32 %v1110, %v582
        %v1118 = vmul.f32 %v1110, %v587
        %v1119 = vmul.f32 %v1110, %v592
        %v1120 = vmul.f32 %v1110, %v597
        %v1121 = vmul.f32 %v1110, %v602
        %v1122 = vmul.f32 %v1110, %v607
        %v1123 = vmul.f32 %v1110, %v612
        %v1124 = vmul.f32 %v1110, %v617
        %v1125 = vmul.f32 %v1110, %v622
        %v1126 = vmul.f32 %v1110, %v627
        %v1127 = vmul.f32 %v1110, %v632
        %v1128 = vmul.f32 %v1110, %v637
        %v1129 = vmul.f32 %v1110, %v642
        %v1130 = vmul.f32 %v1110, %v647
        %v1131 = vmul.f32 %v1110, %v652
        %v1132 = vmul.f32 %v1110, %v657
        %v1133 = vmul.f32 %v1110, %v662
        %v1134 = vmul.f32 %v1110, %v667
        %v1135 = vmul.f32 %v1110, %v672
        %v1136 = vmul.f32 %v1110, %v677
        %v1137 = vadd.f32 %v1112, %v925
        %v1138 = vadd.f32 %v1113, %v925
        %v1139 = vadd.f32 %v1114, %v925
        %v1140 = vadd.f32 %v1115, %v925
        %v1141 = vadd.f32 %v1116, %v925
        %v1142 = vadd.f32 %v1117, %v925
        %v1143 = vadd.f32 %v1118, %v925
        %v1144 = vadd.f32 %v1119, %v925
        %v1145 = vadd.f32 %v1120, %v925
        %v1146 = vadd.f32 %v1121, %v925
        %v1147 = vadd.f32 %v1122, %v925
        %v1148 = vadd.f32 %v1123, %v925
        %v1149 = vadd.f32 %v1124, %v925
        %v1150 = vadd.f32 %v1125, %v925
        %v1151 = vadd.f32 %v1126, %v925
        %v1152 = vadd.f32 %v1127, %v925
        %v1153 = vadd.f32 %v1128, %v925
        %v1154 = vadd.f32 %v1129, %v925
        %v1155 = vadd.f32 %v1130, %v925
        %v1156 = vadd.f32 %v1131, %v925
        %v1157 = vadd.f32 %v1132, %v925
        %v1158 = vadd.f32 %v1133, %v925
        %v1159 = vadd.f32 %v1134, %v925
        %v1160 = vadd.f32 %v1135, %v925
        %v1161 = vadd.f32 %v1136, %v925
        %v1162 = vmax.f32 %v1137, 0.0
        %v1163 = vmax.f32 %v1138, 0.0
        %v1164 = vmax.f32 %v1139, 0.0
        %v1165 = vmax.f32 %v1140, 0.0
        %v1166 = vmax.f32 %v1141, 0.0
        %v1167 = vmax.f32 %v1142, 0.0
        %v1168 = vmax.f32 %v1143, 0.0
        %v1169 = vmax.f32 %v1144, 0.0
        %v1170 = vmax.f32 %v1145, 0.0
        %v1171 = vmax.f32 %v1146, 0.0
        %v1172 = vmax.f32 %v1147, 0.0
        %v1173 = vmax.f32 %v1148, 0.0
        %v1174 = vmax.f32 %v1149, 0.0
        %v1175 = vmax.f32 %v1150, 0.0
        %v1176 = vmax.f32 %v1151, 0.0
        %v1177 = vmax.f32 %v1152, 0.0
        %v1178 = vmax.f32 %v1153, 0.0
        %v1179 = vmax.f32 %v1154, 0.0
        %v1180 = vmax.f32 %v1155, 0.0
        %v1181 = vmax.f32 %v1156, 0.0
        %v1182 = vmax.f32 %v1157, 0.0
        %v1183 = vmax.f32 %v1158, 0.0
        %v1184 = vmax.f32 %v1159, 0.0
        %v1185 = vmax.f32 %v1160, 0.0
        %v1186 = vmax.f32 %v1161, 0.0
        %v1187 = vadd.f32 %v1082, %v1162
        %v1188 = vadd.f32 %v1083, %v1163
        %v1189 = vadd.f32 %v1084, %v1164
        %v1190 = vadd.f32 %v1085, %v1165
        %v1191 = vadd.f32 %v1086, %v1166
        %v1192 = vadd.f32 %v1087, %v1167
        %v1193 = vadd.f32 %v1088, %v1168
        %v1194 = vadd.f32 %v1089, %v1169
        %v1195 = vadd.f32 %v1090, %v1170
        %v1196 = vadd.f32 %v1091, %v1171
        %v1197 = vadd.f32 %v1092, %v1172
        %v1198 = vadd.f32 %v1093, %v1173
        %v1199 = vadd.f32 %v1094, %v1174
        %v1200 = vadd.f32 %v1095, %v1175
        %v1201 = vadd.f32 %v1096, %v1176
        %v1202 = vadd.f32 %v1097, %v1177
        %v1203 = vadd.f32 %v1098, %v1178
        %v1204 = vadd.f32 %v1099, %v1179
        %v1205 = vadd.f32 %v1100, %v1180
        %v1206 = vadd.f32 %v1101, %v1181
        %v1207 = vadd.f32 %v1102, %v1182
        %v1208 = vadd.f32 %v1103, %v1183
        %v1209 = vadd.f32 %v1104, %v1184
        %v1210 = vadd.f32 %v1105, %v1185
        %v1211 = vadd.f32 %v1106, %v1186
        %1212 = vrot.lane.b32.xlu0 %v888, 125
        %v1213 = vpop.permute.xlu0 %1212
        %s1214 = vtos %v1213
        %v1215 = vstv %s1214
        %v1217 = vmul.f32 %v1215, %v557
        %v1218 = vmul.f32 %v1215, %v562
        %v1219 = vmul.f32 %v1215, %v567
        %v1220 = vmul.f32 %v1215, %v572
        %v1221 = vmul.f32 %v1215, %v577
        %v1222 = vmul.f32 %v1215, %v582
        %v1223 = vmul.f32 %v1215, %v587
        %v1224 = vmul.f32 %v1215, %v592
        %v1225 = vmul.f32 %v1215, %v597
        %v1226 = vmul.f32 %v1215, %v602
        %v1227 = vmul.f32 %v1215, %v607
        %v1228 = vmul.f32 %v1215, %v612
        %v1229 = vmul.f32 %v1215, %v617
        %v1230 = vmul.f32 %v1215, %v622
        %v1231 = vmul.f32 %v1215, %v627
        %v1232 = vmul.f32 %v1215, %v632
        %v1233 = vmul.f32 %v1215, %v637
        %v1234 = vmul.f32 %v1215, %v642
        %v1235 = vmul.f32 %v1215, %v647
        %v1236 = vmul.f32 %v1215, %v652
        %v1237 = vmul.f32 %v1215, %v657
        %v1238 = vmul.f32 %v1215, %v662
        %v1239 = vmul.f32 %v1215, %v667
        %v1240 = vmul.f32 %v1215, %v672
        %v1241 = vmul.f32 %v1215, %v677
        %v1242 = vadd.f32 %v1217, %v925
        %v1243 = vadd.f32 %v1218, %v925
        %v1244 = vadd.f32 %v1219, %v925
        %v1245 = vadd.f32 %v1220, %v925
        %v1246 = vadd.f32 %v1221, %v925
        %v1247 = vadd.f32 %v1222, %v925
        %v1248 = vadd.f32 %v1223, %v925
        %v1249 = vadd.f32 %v1224, %v925
        %v1250 = vadd.f32 %v1225, %v925
        %v1251 = vadd.f32 %v1226, %v925
        %v1252 = vadd.f32 %v1227, %v925
        %v1253 = vadd.f32 %v1228, %v925
        %v1254 = vadd.f32 %v1229, %v925
        %v1255 = vadd.f32 %v1230, %v925
        %v1256 = vadd.f32 %v1231, %v925
        %v1257 = vadd.f32 %v1232, %v925
        %v1258 = vadd.f32 %v1233, %v925
        %v1259 = vadd.f32 %v1234, %v925
        %v1260 = vadd.f32 %v1235, %v925
        %v1261 = vadd.f32 %v1236, %v925
        %v1262 = vadd.f32 %v1237, %v925
        %v1263 = vadd.f32 %v1238, %v925
        %v1264 = vadd.f32 %v1239, %v925
        %v1265 = vadd.f32 %v1240, %v925
        %v1266 = vadd.f32 %v1241, %v925
        %v1267 = vmax.f32 %v1242, 0.0
        %v1268 = vmax.f32 %v1243, 0.0
        %v1269 = vmax.f32 %v1244, 0.0
        %v1270 = vmax.f32 %v1245, 0.0
        %v1271 = vmax.f32 %v1246, 0.0
        %v1272 = vmax.f32 %v1247, 0.0
        %v1273 = vmax.f32 %v1248, 0.0
        %v1274 = vmax.f32 %v1249, 0.0
        %v1275 = vmax.f32 %v1250, 0.0
        %v1276 = vmax.f32 %v1251, 0.0
        %v1277 = vmax.f32 %v1252, 0.0
        %v1278 = vmax.f32 %v1253, 0.0
        %v1279 = vmax.f32 %v1254, 0.0
        %v1280 = vmax.f32 %v1255, 0.0
        %v1281 = vmax.f32 %v1256, 0.0
        %v1282 = vmax.f32 %v1257, 0.0
        %v1283 = vmax.f32 %v1258, 0.0
        %v1284 = vmax.f32 %v1259, 0.0
        %v1285 = vmax.f32 %v1260, 0.0
        %v1286 = vmax.f32 %v1261, 0.0
        %v1287 = vmax.f32 %v1262, 0.0
        %v1288 = vmax.f32 %v1263, 0.0
        %v1289 = vmax.f32 %v1264, 0.0
        %v1290 = vmax.f32 %v1265, 0.0
        %v1291 = vmax.f32 %v1266, 0.0
        %v1292 = vadd.f32 %v1187, %v1267
        %v1293 = vadd.f32 %v1188, %v1268
        %v1294 = vadd.f32 %v1189, %v1269
        %v1295 = vadd.f32 %v1190, %v1270
        %v1296 = vadd.f32 %v1191, %v1271
        %v1297 = vadd.f32 %v1192, %v1272
        %v1298 = vadd.f32 %v1193, %v1273
        %v1299 = vadd.f32 %v1194, %v1274
        %v1300 = vadd.f32 %v1195, %v1275
        %v1301 = vadd.f32 %v1196, %v1276
        %v1302 = vadd.f32 %v1197, %v1277
        %v1303 = vadd.f32 %v1198, %v1278
        %v1304 = vadd.f32 %v1199, %v1279
        %v1305 = vadd.f32 %v1200, %v1280
        %v1306 = vadd.f32 %v1201, %v1281
        %v1307 = vadd.f32 %v1202, %v1282
        %v1308 = vadd.f32 %v1203, %v1283
        %v1309 = vadd.f32 %v1204, %v1284
        %v1310 = vadd.f32 %v1205, %v1285
        %v1311 = vadd.f32 %v1206, %v1286
        %v1312 = vadd.f32 %v1207, %v1287
        %v1313 = vadd.f32 %v1208, %v1288
        %v1314 = vadd.f32 %v1209, %v1289
        %v1315 = vadd.f32 %v1210, %v1290
        %v1316 = vadd.f32 %v1211, %v1291
        %vm1317 = vcmask 130112
        %v1318 = vsel %vm1317, %v1292, 0.0
        %v1319 = vsel %vm1317, %v1293, 0.0
        %v1320 = vadd.f32 %v1318, %v1319
        %v1321 = vsel %vm1317, %v1294, 0.0
        %v1322 = vadd.f32 %v1320, %v1321
        %v1323 = vsel %vm1317, %v1295, 0.0
        %v1324 = vadd.f32 %v1322, %v1323
        %v1325 = vsel %vm1317, %v1296, 0.0
        %v1326 = vadd.f32 %v1324, %v1325
        %v1327 = vsel %vm1317, %v1297, 0.0
        %v1328 = vadd.f32 %v1326, %v1327
        %v1329 = vsel %vm1317, %v1298, 0.0
        %v1330 = vadd.f32 %v1328, %v1329
        %v1331 = vsel %vm1317, %v1299, 0.0
        %v1332 = vadd.f32 %v1330, %v1331
        %v1333 = vsel %vm1317, %v1300, 0.0
        %v1334 = vadd.f32 %v1332, %v1333
        %v1335 = vsel %vm1317, %v1301, 0.0
        %v1336 = vadd.f32 %v1334, %v1335
        %v1337 = vsel %vm1317, %v1302, 0.0
        %v1338 = vadd.f32 %v1336, %v1337
        %v1339 = vsel %vm1317, %v1303, 0.0
        %v1340 = vadd.f32 %v1338, %v1339
        %v1341 = vsel %vm1317, %v1304, 0.0
        %v1342 = vadd.f32 %v1340, %v1341
        %v1343 = vsel %vm1317, %v1305, 0.0
        %v1344 = vadd.f32 %v1342, %v1343
        %v1345 = vsel %vm1317, %v1306, 0.0
        %v1346 = vadd.f32 %v1344, %v1345
        %v1347 = vsel %vm1317, %v1307, 0.0
        %v1348 = vadd.f32 %v1346, %v1347
        %v1349 = vsel %vm1317, %v1308, 0.0
        %v1350 = vadd.f32 %v1348, %v1349
        %v1351 = vsel %vm1317, %v1309, 0.0
        %v1352 = vadd.f32 %v1350, %v1351
        %v1353 = vsel %vm1317, %v1310, 0.0
        %v1354 = vadd.f32 %v1352, %v1353
        %v1355 = vsel %vm1317, %v1311, 0.0
        %v1356 = vadd.f32 %v1354, %v1355
        %v1357 = vsel %vm1317, %v1312, 0.0
        %v1358 = vadd.f32 %v1356, %v1357
        %v1359 = vsel %vm1317, %v1313, 0.0
        %v1360 = vadd.f32 %v1358, %v1359
        %v1361 = vsel %vm1317, %v1314, 0.0
        %v1362 = vadd.f32 %v1360, %v1361
        %v1363 = vsel %vm1317, %v1315, 0.0
        %v1364 = vadd.f32 %v1362, %v1363
        %vm1365 = vcmask 126016
        %v1366 = vsel %vm1365, %v1316, 0.0
        %v1367 = vadd.f32 %v1364, %v1366
        %v1368 = vrot.slane %v1367, 4
        %v1369 = vadd.f32 %v1367, %v1368
        %v1370 = vrot.slane %v1369, 2
        %v1371 = vadd.f32 %v1369, %v1370
        %v1372 = vrot.slane %v1371, 1
        %v1373 = vadd.f32 %v1371, %v1372
        %v1374 = vmul.f32 %v1373, 0.0012755102
        %v1375 = vld [vmem:[%s7] sm:$0xff]
        %v1376 = vld [vmem:[%s8] sm:$0x1]
        %1378 = vrot.lane.b32.xlu0 %v1374, 120
        %v1379 = vpop.permute.xlu0 %1378
        %v1380 = vsel %vm737, %v1379, 0
        %1382 = vmatprep.subr.mxu0 0.0
        %1383 = vmatpush1.msra.mxu0 0.0
        %1384 = vmatprep.subr.mxu0 0.0
        %1385 = vmatpush1.msra.mxu0 0.0
        %1386 = vmatprep.subr.mxu0 0.0
        %1387 = vmatpush1.msra.mxu0 0.0
        %1388 = vmatprep.subr.mxu0 0.0
        %1389 = vmatpush1.msra.mxu0 0.0
        %1390 = vmatprep.subr.mxu0 0.0
        %1391 = vmatpush1.msra.mxu0 0.0
        %1392 = vmatprep.subr.mxu0 0.0
        %1393 = vmatpush1.msra.mxu0 0.0
        %1394 = vmatprep.subr.mxu0 0.0
        %1395 = vmatpush1.msra.mxu0 0.0
        %1396 = vmatprep.subr.mxu0 0.0
        %1397 = vmatpush1.msra.mxu0 0.0
        %1398 = vmatprep.subr.mxu0 0.0
        %1399 = vmatpush1.msra.mxu0 0.0
        %1400 = vmatprep.subr.mxu0 0.0
        %1401 = vmatpush1.msra.mxu0 0.0
        %1402 = vmatprep.subr.mxu0 0.0
        %1403 = vmatpush1.msra.mxu0 0.0
        %1404 = vmatprep.subr.mxu0 0.0
        %1405 = vmatpush1.msra.mxu0 0.0
        %1406 = vmatprep.subr.mxu0 0.0
        %1407 = vmatpush1.msra.mxu0 0.0
        %1408 = vmatprep.subr.mxu0 0.0
        %1409 = vmatpush1.msra.mxu0 0.0
        %1410 = vmatprep.subr.mxu0 0.0
        %1411 = vmatpush1.msra.mxu0 0.0
        %1412 = vmatprep.subr.mxu0 0.0
        %1413 = vmatpush1.msra.mxu0 %v1375
        %1414 = vmatprep.subr.mxu0 0.0
        %1415 = vmatpush2.msra.mxu0 0.0
        %1416 = vmatprep.subr.mxu0 0.0
        %1417 = vmatpush2.msra.mxu0 0.0
        %1418 = vmatprep.subr.mxu0 0.0
        %1419 = vmatpush2.msra.mxu0 0.0
        %1420 = vmatprep.subr.mxu0 0.0
        %1421 = vmatpush2.msra.mxu0 0.0
        %1422 = vmatprep.subr.mxu0 0.0
        %1423 = vmatpush2.msra.mxu0 0.0
        %1424 = vmatprep.subr.mxu0 0.0
        %1425 = vmatpush2.msra.mxu0 0.0
        %1426 = vmatprep.subr.mxu0 0.0
        %1427 = vmatpush2.msra.mxu0 0.0
        %1428 = vmatprep.subr.mxu0 0.0
        %1429 = vmatpush2.msra.mxu0 0.0
        %1430 = vmatprep.subr.mxu0 0.0
        %1431 = vmatpush2.msra.mxu0 0.0
        %1432 = vmatprep.subr.mxu0 0.0
        %1433 = vmatpush2.msra.mxu0 0.0
        %1434 = vmatprep.subr.mxu0 0.0
        %1435 = vmatpush2.msra.mxu0 0.0
        %1436 = vmatprep.subr.mxu0 0.0
        %1437 = vmatpush2.msra.mxu0 0.0
        %1438 = vmatprep.subr.mxu0 0.0
        %1439 = vmatpush2.msra.mxu0 0.0
        %1440 = vmatprep.subr.mxu0 0.0
        %1441 = vmatpush2.msra.mxu0 0.0
        %1442 = vmatprep.subr.mxu0 0.0
        %1443 = vmatpush2.msra.mxu0 0.0
        %1444 = vmatprep.subr.mxu0 0.0
        %1445 = vmatpush2.msra.mxu0 0.0
        %1446 = vmatprep.mubr.f32.mxu0 0.0
        %1447 = vmatmul.mubr.f32.gmra.mxu0 %v1380
        %v1448 = vpop.f32.mrf.mxu0
        %v1449 = vadd.f32 %v1376, %v1448
        %v1450 = vpop.f32.mrf.mxu0
        %1451 = vdwg.mxu0
        %vm1452 = vcmask 73728
        %1453 = vst.msk [vmem:[%s366] sm:$0x1] %vm1452, %v1449
        %s1454 = sand.u32 %s235, 1
        %s1455 = scalar_lea.sflag [#allocation3], %s1454
        %s1456 = sand.u32 %s235, 1
        %s1457 = scalar_lea.vmem [#allocation2], %s1456
        %s1458 = sand.u32 %s261, 1
        %s1459 = scalar_lea.sflag [#allocation5], %s1458
        %s1460 = sand.u32 %s261, 1
        %s1461 = scalar_lea.vmem [#allocation4], %s1460
        // Predicated region
        $region57: #{insta_model_forward.1} parent=55 // pred_check
          %p1462 = pneg %p245
        $region58: #{insta_model_forward.1} parent=55 // pred_check_branch
          %1464 = sbr.rel (%p1462) target = $region60
        $region59: #{insta_model_forward.1} parent=55 // pred_region
          %s1466 = ssub.s32 16, 16
          %1467 = vsyncadd %s1455, %s1466
          %s1468 = smul.addr %s28, 16
          %s1469 = scalar_lea.hbm %s9, %s1468
          %s1471 = sshll.u32 %s1457, 4
          %s1472 = int_to_ptr.vmem [resolvable:$true] %s1471
          %1474 = dma.vmem_to_hbm [thread:$0]  %s1472, 16, %s1469, %s1455
        $region60: #{insta_model_forward.1} parent=55 // pred_fallthru
          _
        // Predicated region
        $region61: #{insta_model_forward.1} parent=55 // pred_check
          %p1475 = pneg %p271
        $region62: #{insta_model_forward.1} parent=55 // pred_check_branch
          %1477 = sbr.rel (%p1475) target = $region64
        $region63: #{insta_model_forward.1} parent=55 // pred_region
          %s1479 = ssub.s32 16, 16
          %1480 = vsyncadd %s1459, %s1479
          %s1481 = smul.addr %s28, 16
          %s1482 = scalar_lea.hbm %s10, %s1481
          %s1484 = sshll.u32 %s1461, 4
          %s1485 = int_to_ptr.vmem [resolvable:$true] %s1484
          %1487 = dma.vmem_to_hbm [thread:$0]  %s1485, 16, %s1482, %s1459
        $region64: #{insta_model_forward.1} parent=55 // pred_fallthru
          _
      $region56: #{insta_model_forward.1} parent=5 // pred_fallthru
        _
      %p1488 = scmp.le.s32.totalorder 2, %s23
      // Predicated region
      $region65: #{insta_model_forward.1} parent=5 // pred_check
        %p1489 = pneg %p1488
      $region66: #{insta_model_forward.1} parent=5 // pred_check_branch
        %1491 = sbr.rel (%p1489) target = $region68
      $region67: #{insta_model_forward.1} parent=5 // pred_region
        %s1492 = ssub.s32 %s23, 2
        // Predicated region
        $region69: #{insta_model_forward.1} parent=67 // pred_check
          %p1493 = pneg %p251
        $region70: #{insta_model_forward.1} parent=67 // pred_check_branch
          %1495 = sbr.rel (%p1493) target = $region72
        $region71: #{insta_model_forward.1} parent=67 // pred_region
          %s1496 = sand.u32 %s236, 1
          %s1497 = scalar_lea.sflag [#allocation3], %s1496
          %s1498 = sand.u32 %s236, 1
          %s1499 = scalar_lea.vmem [#allocation2], %s1498
          %1500 = dma.done %s1497, 16
        $region72: #{insta_model_forward.1} parent=67 // pred_fallthru
          _
        // Predicated region
        $region73: #{insta_model_forward.1} parent=67 // pred_check
          %p1501 = pneg %p277
        $region74: #{insta_model_forward.1} parent=67 // pred_check_branch
          %1503 = sbr.rel (%p1501) target = $region76
        $region75: #{insta_model_forward.1} parent=67 // pred_region
          %s1504 = sand.u32 %s262, 1
          %s1505 = scalar_lea.sflag [#allocation5], %s1504
          %s1506 = sand.u32 %s262, 1
          %s1507 = scalar_lea.vmem [#allocation4], %s1506
          %1508 = dma.done %s1505, 16
        $region76: #{insta_model_forward.1} parent=67 // pred_fallthru
          _
      $region68: #{insta_model_forward.1} parent=5 // pred_fallthru
        _
    $region6: #{insta_model_forward.1} parent=1 // loop_footer
      %s27 = sadd.s32 1, %s23
    $region7: #{insta_model_forward.1} parent=1 // loop_footer_branch
      %22 = sbr.rel target = $region3
    $region8: #{insta_model_forward.1} parent=1 // loop_exit
      _
    %1509 = vsyncpa [#allocation3], 1
    %s1510 = scalar_lea.sflag [#allocation3], 1
    %1511 = vsyncpa %s1510, 1
    %1512 = vsyncpa [#allocation5], 1
    %s1513 = scalar_lea.sflag [#allocation5], 1
    %1514 = vsyncpa %s1513, 1

</llo_original>
